<compile_context>
chip_gen: v7x
topology: tpu7x:2x2x1
jax: 0.10.0
libtpu: 0.0.40
codegen_flags: <defaults>
</compile_context>

<pallas_src>
import jax
import jax.numpy as jnp
from jax import lax
from jax.experimental import pallas as pl
from jax.experimental.pallas import tpu as pltpu

_EPS = 1e-5


def _round_up(n, m):
    return ((n + m - 1) // m) * m


def _pad2(a, rows, cols):
    return jnp.pad(a, ((0, rows - a.shape[0]), (0, cols - a.shape[1])))


def _leaky(x, slope=0.2):
    return jnp.where(x >= 0, x, slope * x)


# ------------------------------ fused kernel ---------------------------------

def _make_fused_kernel(*, has_fc3, final_nl, B, tile_b):
    ragged = (B % tile_b) != 0
    n_first = min(tile_b, B)          # valid rows in batch tile 0
    inv_n = 1.0 / float(B)

    def _accum_centered(t, h, c_ref, s_ref, q_ref):
        """Shifted sum / sumsq: center on tile-0's per-feature mean (stable var)."""

        @pl.when(t == 0)
        def _():
            if n_first < tile_b:      # tile 0 itself contains padded rows
                r0 = lax.broadcasted_iota(jnp.int32, (tile_b, 1), 0)
                h0 = jnp.where(r0 < B, h, 0.0)
            else:
                h0 = h
            c_ref[...] = jnp.sum(h0, axis=0, keepdims=True) * (1.0 / n_first)
            s_ref[...] = jnp.zeros_like(s_ref)
            q_ref[...] = jnp.zeros_like(q_ref)

        d = h - c_ref[...]
        if ragged:                    # mask padded batch rows (skipped if aligned)
            rows = t * tile_b + lax.broadcasted_iota(jnp.int32, (tile_b, 1), 0)
            d = jnp.where(rows < B, d, 0.0)
        s_ref[...] += jnp.sum(d, axis=0, keepdims=True)
        q_ref[...] += jnp.sum(d * d, axis=0, keepdims=True)

    def _finalize_bn(c_ref, s_ref, q_ref, g_ref, be_ref):
        """mean = c + s/B ; var = q/B - (s/B)^2 ; return fused (scale, shift)."""
        s = s_ref[...] * inv_n
        var = jnp.maximum(q_ref[...] * inv_n - s * s, 0.0)
        mean = c_ref[...] + s
        scale = g_ref[...] * lax.rsqrt(var + _EPS)
        shift = be_ref[...] - mean * scale
        return scale, shift

    def kernel(x_ref, w1_ref, b1_ref, g1_ref, be1_ref,
               w2_ref, b2_ref, g2_ref, be2_ref, *rest):
        if has_fc3:
            w3_ref, b3_ref = rest[0], rest[1]
            rest = rest[2:]
        (o_ref, h1s, h2s, xins, c1, s1, q1, c2, s2, q2) = rest

        p = pl.program_id(0)
        t = pl.program_id(1)
        row0 = pl.multiple_of(t * tile_b, tile_b)
        bsl = pl.ds(row0, tile_b)

        # phase 0: fc1 (+ shortcut); park h1 / shortcut in VMEM; BN1 stats.
        @pl.when(p == 0)
        def _phase0():
            xb = x_ref[...]                                            # bf16
            h1 = jnp.dot(xb, w1_ref[...],
                         preferred_element_type=jnp.float32) + b1_ref[...]
            h1s[bsl, :] = h1.astype(jnp.bfloat16)
            if has_fc3:
                xin = _leaky(jnp.dot(xb, w3_ref[...],
                                     preferred_element_type=jnp.float32)
                             + b3_ref[...])
                xins[bsl, :] = xin.astype(jnp.bfloat16)
            else:
                xins[bsl, :] = xb                                      # Fin_p == Fout_p
            _accum_centered(t, h1, c1, s1, q1)

        # phase 1: finalize BN1, a1 = leaky(BN1(h1)), fc2; park h2; BN2 stats.
        @pl.when(p == 1)
        def _phase1():
            @pl.when(t == 0)
            def _():
                scale, shift = _finalize_bn(c1, s1, q1, g1_ref, be1_ref)
                s1[...] = scale          # reuse stat scratch as (scale, shift)
                q1[...] = shift
            a1 = _leaky(h1s[bsl, :].astype(jnp.float32) * s1[...] + q1[...])
            h2 = jnp.dot(a1.astype(jnp.bfloat16), w2_ref[...],
                         preferred_element_type=jnp.float32) + b2_ref[...]
            h2s[bsl, :] = h2
            _accum_centered(t, h2, c2, s2, q2)

        # phase 2: finalize BN2, out = shortcut + BN2(h2) (+ LeakyReLU).
        @pl.when(p == 2)
        def _phase2():
            @pl.when(t == 0)
            def _():
                scale, shift = _finalize_bn(c2, s2, q2, g2_ref, be2_ref)
                s2[...] = scale
                q2[...] = shift
            out = xins[bsl, :].astype(jnp.float32) + h2s[bsl, :] * s2[...] + q2[...]
            if final_nl:
                out = _leaky(out)
            o_ref[...] = out.astype(o_ref.dtype)

    return kernel


# --------------------------------- wrapper -----------------------------------

def resblock_forward(x, params, Fin, Fout, final_nl=True, *, tile_b=None):
    """Pallas ResBlock forward. x: (B, Fin) f32 -> (B, Fout) f32."""
    B = x.shape[0]
    assert x.shape == (B, Fin)
    has_fc3 = "w3" in params
    assert has_fc3 == (Fin != Fout)
    H = params["w1"].shape[1]

    LANE, SUB16 = 128, 16             # 16: bf16 packed-sublane slice granularity
    H_p = _round_up(H, LANE)
    Fout_p = _round_up(Fout, LANE)
    # Contraction dim is not padded to a lane multiple (block spans the full dim);
    # the identity shortcut needs Fin_p == Fout_p.
    Fin_p = Fout_p if not has_fc3 else _round_up(Fin, 8)

    if tile_b is None:
        tile_b = min(512, _round_up(B, SUB16))
    tile_b = max(SUB16, _round_up(tile_b, SUB16))
    B_pad = _round_up(B, tile_b)
    T = B_pad // tile_b

    f32, bf16 = jnp.float32, jnp.bfloat16

    # ---- pad / cast parameters (layout plumbing; sliced back at the end) -----
    xp = _pad2(x, B_pad, Fin_p).astype(bf16)          # bf16 at the HBM boundary
    w1 = _pad2(params["w1"], Fin_p, H_p).astype(bf16)
    b1 = _pad2(params["b1"], 1, H_p).astype(f32)
    g1 = _pad2(params["g1"], 1, H_p).astype(f32)
    be1 = _pad2(params["be1"], 1, H_p).astype(f32)
    w2 = _pad2(params["w2"], H_p, Fout_p).astype(bf16)
    b2 = _pad2(params["b2"], 1, Fout_p).astype(f32)
    g2 = _pad2(params["g2"], 1, Fout_p).astype(f32)
    be2 = _pad2(params["be2"], 1, Fout_p).astype(f32)

    inputs = [xp, w1, b1, g1, be1, w2, b2, g2, be2]

    def _const(shape):
        # TODO(synk): pipeline_mode=pl.Buffered(1) would drop the redundant second
        # buffer of these never-changing resident operands; default kept for
        # compatibility (cost: one extra copy per weight, accounted below).
        return pl.BlockSpec(shape, lambda p, t: (0, 0))

    in_specs = [
        # x: streamed during phase 0, pinned to block 0 afterwards (no re-stream).
        pl.BlockSpec((tile_b, Fin_p), lambda p, t: (jnp.where(p == 0, t, 0), 0)),
        _const((Fin_p, H_p)), _const((1, H_p)), _const((1, H_p)), _const((1, H_p)),
        _const((H_p, Fout_p)), _const((1, Fout_p)), _const((1, Fout_p)),
        _const((1, Fout_p)),
    ]
    if has_fc3:
        w3 = _pad2(params["w3"], Fin_p, Fout_p).astype(bf16)
        b3 = _pad2(params["b3"], 1, Fout_p).astype(f32)
        inputs += [w3, b3]
        in_specs += [_const((Fin_p, Fout_p)), _const((1, Fout_p))]

    # out: only advances (and is only written back) during phase 2.
    out_spec = pl.BlockSpec((tile_b, Fout_p),
                            lambda p, t: (jnp.where(p == 2, t, 0), 0))

    scratch_shapes = [
        pltpu.VMEM((B_pad, H_p), bf16),        # h1  (VMEM resident, never hits HBM)
        pltpu.VMEM((B_pad, Fout_p), f32),      # h2
        pltpu.VMEM((B_pad, Fout_p), bf16),     # shortcut (xin)
        pltpu.VMEM((1, H_p), f32),             # c1 (BN1 center)
        pltpu.VMEM((1, H_p), f32),             # s1 -> BN1 scale
        pltpu.VMEM((1, H_p), f32),             # q1 -> BN1 shift
        pltpu.VMEM((1, Fout_p), f32),          # c2 (BN2 center)
        pltpu.VMEM((1, Fout_p), f32),          # s2 -> BN2 scale
        pltpu.VMEM((1, Fout_p), f32),          # q2 -> BN2 shift
    ]

    # ---- per-generation VMEM budget (v5e/v6e: 128 MiB, v7x: 64 MiB per TC) ----
    try:
        vmem_cap = int(pltpu.get_tpu_info().vmem_capacity_bytes)
    except Exception:
        vmem_cap = 64 * 1024 * 1024            # conservative fallback (v7x per-TC)
    vmem_limit = int(vmem_cap * 0.8)

    scratch_bytes = (B_pad * H_p * 2 + B_pad * Fout_p * 4 + B_pad * Fout_p * 2
                     + 3 * H_p * 4 + 3 * Fout_p * 4)
    resident_bytes = 2 * sum(int(a.size) * int(a.dtype.itemsize) for a in inputs[1:])
    pipeline_bytes = 2 * tile_b * Fin_p * 2 + 2 * tile_b * Fout_p * 4
    need = scratch_bytes + resident_bytes + pipeline_bytes
    if need + (4 << 20) > vmem_limit:
        raise ValueError(
            f"ResBlock fused kernel needs ~{need >> 20} MiB VMEM "
            f"(budget {vmem_limit >> 20} MiB); reduce tile_b / batch "
            f"or add an HBM-streamed fallback.")

    kernel = _make_fused_kernel(has_fc3=has_fc3, final_nl=final_nl,
                                B=B, tile_b=tile_b)

    flops = (2 * B_pad * Fin_p * H_p + 2 * B_pad * H_p * Fout_p
             + 12 * B_pad * (H_p + Fout_p))
    if has_fc3:
        flops += 2 * B_pad * Fin_p * Fout_p
    bytes_accessed = (2 * B_pad * Fin_p + 4 * B_pad * Fout_p
                      + sum(int(a.size) * int(a.dtype.itemsize) for a in inputs[1:]))

    out_p = pl.pallas_call(
        kernel,
        grid=(3, T),
        in_specs=in_specs,
        out_specs=out_spec,
        out_shape=jax.ShapeDtypeStruct((B_pad, Fout_p), f32),
        scratch_shapes=scratch_shapes,
        compiler_params=pltpu.CompilerParams(
            dimension_semantics=("arbitrary", "arbitrary"),
            vmem_limit_bytes=vmem_limit),
        cost_estimate=pl.CostEstimate(flops=flops,
                                      transcendentals=H_p + Fout_p,
                                      bytes_accessed=bytes_accessed),
    )(*inputs)

    return out_p[:B, :Fout]


# ------------------------ reference & parameter init --------------------------

def _batchnorm_train_ref(h, gamma, beta, eps=_EPS):
    mu = jnp.mean(h, axis=0, keepdims=True)
    var = jnp.mean((h - mu) * (h - mu), axis=0, keepdims=True)
    return (h - mu) * lax.rsqrt(var + eps) * gamma + beta


def resblock_forward_ref(x, params, Fin, Fout, final_nl=True):
    """Pure-JAX f32 reference matching the PyTorch forward (training-mode BN)."""
    if Fin != Fout:
        xin = _leaky(x @ params["w3"] + params["b3"])
    else:
        xin = x
    h = x @ params["w1"] + params["b1"]
    h = _leaky(_batchnorm_train_ref(h, params["g1"], params["be1"]))
    h = h @ params["w2"] + params["b2"]
    h = _batchnorm_train_ref(h, params["g2"], params["be2"])
    out = xin + h
    return _leaky(out) if final_nl else out


def init_resblock_params(key, Fin, Fout, n_neurons=512, dtype=jnp.float32):
    """Parameter init mirroring the PyTorch module's shapes (W stored (in, out))."""
    keys = jax.random.split(key, 8)

    def lin(kw, kb, fan_in, fan_out):
        bound = 1.0 / float(fan_in) ** 0.5
        w = jax.random.uniform(kw, (fan_in, fan_out), dtype, -bound, bound)
        b = jax.random.uniform(kb, (1, fan_out), dtype, -bound, bound)
        return w, b

    w1, b1 = lin(keys[0], keys[1], Fin, n_neurons)
    w2, b2 = lin(keys[2], keys[3], n_neurons, Fout)
    params = {
        "w1": w1, "b1": b1,
        "g1": jnp.ones((1, n_neurons), dtype), "be1": jnp.zeros((1, n_neurons), dtype),
        "w2": w2, "b2": b2,
        "g2": jnp.ones((1, Fout), dtype), "be2": jnp.zeros((1, Fout), dtype),
    }
    if Fin != Fout:
        w3, b3 = lin(keys[4], keys[5], Fin, Fout)
        params["w3"], params["b3"] = w3, b3
    return params


if __name__ == "__main__":
    key = jax.random.PRNGKey(0)
    B, n_neurons = 20, 128

    # (Fin, Fout), tile_b, final_nl:
    #  - fc3-shortcut case with explicit small tiles -> multi-tile + ragged last tile
    #  - identity case with default tiles            -> single ragged tile
    #  - identity case without the final LeakyReLU
    cases = [((32, 64), 16, True), ((64, 64), None, True), ((64, 64), None, False)]

    for (Fin, Fout), tb, fnl in cases:
        key, kx, kp = jax.random.split(key, 3)
        x = jax.random.normal(kx, (B, Fin), jnp.float32)
        params = init_resblock_params(kp, Fin, Fout, n_neurons)

        out = resblock_forward(x, params, Fin, Fout, final_nl=fnl, tile_b=tb)
        out = jax.block_until_ready(out)

        ref = resblock_forward_ref(x, params, Fin, Fout, final_nl=fnl)
        assert out.shape == (B, Fout)
        # bf16 matmul operands + bf16 VMEM-resident h1/shortcut vs f32 reference.
        err = float(jnp.max(jnp.abs(out - ref)))
        assert jnp.allclose(out, ref, atol=8e-2, rtol=8e-2), (
            f"mismatch (Fin={Fin}, Fout={Fout}, final_nl={fnl}), max abs err {err}")

    print("KERNEL_OK")
</pallas_src>

<mosaic_0001>
module attributes {stable_mosaic.version = 11 : i64} {
  func.func @kernel(%arg0: i32, %arg1: i32, %arg2: memref<16x32xbf16, #tpu.memory_space<vmem>>, %arg3: memref<32x128xbf16, #tpu.memory_space<vmem>>, %arg4: memref<1x128xf32, #tpu.memory_space<vmem>>, %arg5: memref<1x128xf32, #tpu.memory_space<vmem>>, %arg6: memref<1x128xf32, #tpu.memory_space<vmem>>, %arg7: memref<128x128xbf16, #tpu.memory_space<vmem>>, %arg8: memref<1x128xf32, #tpu.memory_space<vmem>>, %arg9: memref<1x128xf32, #tpu.memory_space<vmem>>, %arg10: memref<1x128xf32, #tpu.memory_space<vmem>>, %arg11: memref<32x128xbf16, #tpu.memory_space<vmem>>, %arg12: memref<1x128xf32, #tpu.memory_space<vmem>>, %arg13: memref<16x128xf32, #tpu.memory_space<vmem>>, %arg14: memref<32x128xbf16, #tpu.memory_space<vmem>>, %arg15: memref<32x128xf32, #tpu.memory_space<vmem>>, %arg16: memref<32x128xbf16, #tpu.memory_space<vmem>>, %arg17: memref<1x128xf32, #tpu.memory_space<vmem>>, %arg18: memref<1x128xf32, #tpu.memory_space<vmem>>, %arg19: memref<1x128xf32, #tpu.memory_space<vmem>>, %arg20: memref<1x128xf32, #tpu.memory_space<vmem>>, %arg21: memref<1x128xf32, #tpu.memory_space<vmem>>, %arg22: memref<1x128xf32, #tpu.memory_space<vmem>>) attributes {dimension_semantics = [#tpu.dimension_semantics<arbitrary>, #tpu.dimension_semantics<arbitrary>], iteration_bounds = array<i64: 3, 2>, scalar_prefetch = 0 : i64, scratch_operands = 9 : i64, tpu.core_type = #tpu.core_type<tc>, window_params = [{transform_indices = @transform_0, window_bounds = array<i64: 16, 32>}, {pipeline_mode = #tpu.pipeline_mode<synchronous>, transform_indices = @transform_1, window_bounds = array<i64: 32, 128>}, {pipeline_mode = #tpu.pipeline_mode<synchronous>, transform_indices = @transform_2, window_bounds = array<i64: 1, 128>}, {pipeline_mode = #tpu.pipeline_mode<synchronous>, transform_indices = @transform_3, window_bounds = array<i64: 1, 128>}, {pipeline_mode = #tpu.pipeline_mode<synchronous>, transform_indices = @transform_4, window_bounds = array<i64: 1, 128>}, {pipeline_mode = #tpu.pipeline_mode<synchronous>, transform_indices = @transform_5, window_bounds = array<i64: 128, 128>}, {pipeline_mode = #tpu.pipeline_mode<synchronous>, transform_indices = @transform_6, window_bounds = array<i64: 1, 128>}, {pipeline_mode = #tpu.pipeline_mode<synchronous>, transform_indices = @transform_7, window_bounds = array<i64: 1, 128>}, {pipeline_mode = #tpu.pipeline_mode<synchronous>, transform_indices = @transform_8, window_bounds = array<i64: 1, 128>}, {pipeline_mode = #tpu.pipeline_mode<synchronous>, transform_indices = @transform_9, window_bounds = array<i64: 32, 128>}, {pipeline_mode = #tpu.pipeline_mode<synchronous>, transform_indices = @transform_10, window_bounds = array<i64: 1, 128>}, {transform_indices = @transform_11, window_bounds = array<i64: 16, 128>}]} {
    %c16_i32 = arith.constant 16 : i32
    %0 = arith.muli %arg1, %c16_i32 : i32
    %1 = tpu.assume_multiple %0, 16 : i32
    %c0_i32 = arith.constant 0 : i32
    %2 = arith.cmpi eq, %arg0, %c0_i32 : i32
    %3 = arith.extui %2 : i1 to i32
    %c0_i32_0 = arith.constant 0 : i32
    %4 = arith.cmpi ne, %3, %c0_i32_0 : i32
    scf.if %4 {
      %c0 = arith.constant 0 : index
      %c0_3 = arith.constant 0 : index
      %11 = vector.load %arg2[%c0, %c0_3] : memref<16x32xbf16, #tpu.memory_space<vmem>>, vector<16x32xbf16>
      %c0_4 = arith.constant 0 : index
      %c0_5 = arith.constant 0 : index
      %12 = vector.load %arg3[%c0_4, %c0_5] : memref<32x128xbf16, #tpu.memory_space<vmem>>, vector<32x128xbf16>
      %cst = arith.constant dense<0.000000e+00> : vector<16x128xf32>
      %13 = tpu.matmul %11, %12, %cst {dimension_numbers = #tpu.dot_dimension_numbers<[1], [0], [0], [1], [0, 0, 1, 1], [], []>} : vector<16x32xbf16>, vector<32x128xbf16>, vector<16x128xf32> -> vector<16x128xf32>
      %c0_6 = arith.constant 0 : index
      %c0_7 = arith.constant 0 : index
      %14 = vector.load %arg4[%c0_6, %c0_7] : memref<1x128xf32, #tpu.memory_space<vmem>>, vector<1x128xf32>
      %15 = vector.broadcast %14 : vector<1x128xf32> to vector<16x128xf32>
      %16 = arith.addf %13, %15 : vector<16x128xf32>
      %17 = arith.truncf %16 : vector<16x128xf32> to vector<16x128xbf16>
      %18 = arith.index_cast %1 : i32 to index
      %c0_8 = arith.constant 0 : index
      %19 = vector.load %arg14[%18, %c0_8] : memref<32x128xbf16, #tpu.memory_space<vmem>>, vector<16x128xbf16>
      tpu.vector_store %arg14[%18, %c0_8], %17 {strides = array<i32>} : memref<32x128xbf16, #tpu.memory_space<vmem>>, vector<16x128xbf16>,
      %c0_9 = arith.constant 0 : index
      %c0_10 = arith.constant 0 : index
      %20 = vector.load %arg11[%c0_9, %c0_10] : memref<32x128xbf16, #tpu.memory_space<vmem>>, vector<32x128xbf16>
      %cst_11 = arith.constant dense<0.000000e+00> : vector<16x128xf32>
      %21 = tpu.matmul %11, %20, %cst_11 {dimension_numbers = #tpu.dot_dimension_numbers<[1], [0], [0], [1], [0, 0, 1, 1], [], []>} : vector<16x32xbf16>, vector<32x128xbf16>, vector<16x128xf32> -> vector<16x128xf32>
      %c0_12 = arith.constant 0 : index
      %c0_13 = arith.constant 0 : index
      %22 = vector.load %arg12[%c0_12, %c0_13] : memref<1x128xf32, #tpu.memory_space<vmem>>, vector<1x128xf32>
      %23 = vector.broadcast %22 : vector<1x128xf32> to vector<16x128xf32>
      %24 = arith.addf %21, %23 : vector<16x128xf32>
      %cst_14 = arith.constant 0.000000e+00 : f32
      %25 = vector.broadcast %cst_14 : f32 to vector<16x128xf32>
      %26 = arith.cmpf oge, %24, %25 : vector<16x128xf32>
      %cst_15 = arith.constant 2.000000e-01 : f32
      %27 = vector.broadcast %cst_15 : f32 to vector<16x128xf32>
      %28 = arith.mulf %27, %24 : vector<16x128xf32>
      %29 = arith.select %26, %24, %28 : vector<16x128xi1>, vector<16x128xf32>
      %30 = arith.truncf %29 : vector<16x128xf32> to vector<16x128xbf16>
      %31 = arith.index_cast %1 : i32 to index
      %c0_16 = arith.constant 0 : index
      %32 = vector.load %arg16[%31, %c0_16] : memref<32x128xbf16, #tpu.memory_space<vmem>>, vector<16x128xbf16>
      tpu.vector_store %arg16[%31, %c0_16], %30 {strides = array<i32>} : memref<32x128xbf16, #tpu.memory_space<vmem>>, vector<16x128xbf16>,
      %c0_i32_17 = arith.constant 0 : i32
      %33 = arith.cmpi eq, %arg1, %c0_i32_17 : i32
      %34 = arith.extui %33 : i1 to i32
      %c0_i32_18 = arith.constant 0 : i32
      %35 = arith.cmpi ne, %34, %c0_i32_18 : i32
      scf.if %35 {
        %cst_33 = arith.constant dense<0.000000e+00> : vector<128xf32>
        %60 = vector.multi_reduction <add>, %16, %cst_33 [0] : vector<16x128xf32> to vector<128xf32>
        %61 = vector.shape_cast %60 : vector<128xf32> to vector<1x128xf32>
        %cst_34 = arith.constant 6.250000e-02 : f32
        %62 = vector.broadcast %cst_34 : f32 to vector<1x128xf32>
        %63 = arith.mulf %61, %62 : vector<1x128xf32>
        %c0_35 = arith.constant 0 : index
        %c0_36 = arith.constant 0 : index
        %64 = vector.load %arg17[%c0_35, %c0_36] : memref<1x128xf32, #tpu.memory_space<vmem>>, vector<1x128xf32>
        tpu.vector_store %arg17[%c0_35, %c0_36], %63 {strides = array<i32>} : memref<1x128xf32, #tpu.memory_space<vmem>>, vector<1x128xf32>,
        %cst_37 = arith.constant 0.000000e+00 : f32
        %65 = vector.broadcast %cst_37 : f32 to vector<1x128xf32>
        %c0_38 = arith.constant 0 : index
        %c0_39 = arith.constant 0 : index
        %66 = vector.load %arg18[%c0_38, %c0_39] : memref<1x128xf32, #tpu.memory_space<vmem>>, vector<1x128xf32>
        tpu.vector_store %arg18[%c0_38, %c0_39], %65 {strides = array<i32>} : memref<1x128xf32, #tpu.memory_space<vmem>>, vector<1x128xf32>,
        %cst_40 = arith.constant 0.000000e+00 : f32
        %67 = vector.broadcast %cst_40 : f32 to vector<1x128xf32>
        %c0_41 = arith.constant 0 : index
        %c0_42 = arith.constant 0 : index
        %68 = vector.load %arg19[%c0_41, %c0_42] : memref<1x128xf32, #tpu.memory_space<vmem>>, vector<1x128xf32>
        tpu.vector_store %arg19[%c0_41, %c0_42], %67 {strides = array<i32>} : memref<1x128xf32, #tpu.memory_space<vmem>>, vector<1x128xf32>,
      } else {
      }
      %c0_19 = arith.constant 0 : index
      %c0_20 = arith.constant 0 : index
      %36 = vector.load %arg17[%c0_19, %c0_20] : memref<1x128xf32, #tpu.memory_space<vmem>>, vector<1x128xf32>
      %37 = vector.broadcast %36 : vector<1x128xf32> to vector<16x128xf32>
      %38 = arith.subf %16, %37 : vector<16x128xf32>
      %c16_i32_21 = arith.constant 16 : i32
      %39 = arith.muli %arg1, %c16_i32_21 : i32
      %40 = tpu.iota {dimensions = array<i32: 0>} : vector<16x1xi32>
      %41 = vector.broadcast %39 : i32 to vector<16x1xi32>
      %42 = arith.addi %41, %40 : vector<16x1xi32>
      %c20_i32 = arith.constant 20 : i32
      %43 = vector.broadcast %c20_i32 : i32 to vector<16x1xi32>
      %44 = arith.cmpi slt, %42, %43 : vector<16x1xi32>
      %cst_22 = arith.constant 0.000000e+00 : f32
      %45 = vector.shape_cast %44 : vector<16x1xi1> to vector<16x1xi1>
      %46 = vector.broadcast %45 : vector<16x1xi1> to vector<16x128xi1>
      %47 = vector.broadcast %cst_22 : f32 to vector<16x128xf32>
      %48 = arith.select %46, %38, %47 : vector<16x128xi1>, vector<16x128xf32>
      %c0_23 = arith.constant 0 : index
      %c0_24 = arith.constant 0 : index
      %49 = vector.load %arg18[%c0_23, %c0_24] : memref<1x128xf32, #tpu.memory_space<vmem>>, vector<1x128xf32>
      %cst_25 = arith.constant dense<0.000000e+00> : vector<128xf32>
      %50 = vector.multi_reduction <add>, %48, %cst_25 [0] : vector<16x128xf32> to vector<128xf32>
      %51 = vector.shape_cast %50 : vector<128xf32> to vector<1x128xf32>
      %52 = arith.addf %49, %51 : vector<1x128xf32>
      %c0_26 = arith.constant 0 : index
      %c0_27 = arith.constant 0 : index
      %53 = vector.load %arg18[%c0_26, %c0_27] : memref<1x128xf32, #tpu.memory_space<vmem>>, vector<1x128xf32>
      tpu.vector_store %arg18[%c0_26, %c0_27], %52 {strides = array<i32>} : memref<1x128xf32, #tpu.memory_space<vmem>>, vector<1x128xf32>,
      %c0_28 = arith.constant 0 : index
      %c0_29 = arith.constant 0 : index
      %54 = vector.load %arg19[%c0_28, %c0_29] : memref<1x128xf32, #tpu.memory_space<vmem>>, vector<1x128xf32>
      %55 = arith.mulf %48, %48 : vector<16x128xf32>
      %cst_30 = arith.constant dense<0.000000e+00> : vector<128xf32>
      %56 = vector.multi_reduction <add>, %55, %cst_30 [0] : vector<16x128xf32> to vector<128xf32>
      %57 = vector.shape_cast %56 : vector<128xf32> to vector<1x128xf32>
      %58 = arith.addf %54, %57 : vector<1x128xf32>
      %c0_31 = arith.constant 0 : index
      %c0_32 = arith.constant 0 : index
      %59 = vector.load %arg19[%c0_31, %c0_32] : memref<1x128xf32, #tpu.memory_space<vmem>>, vector<1x128xf32>
      tpu.vector_store %arg19[%c0_31, %c0_32], %58 {strides = array<i32>} : memref<1x128xf32, #tpu.memory_space<vmem>>, vector<1x128xf32>,
    } else {
    }
    %c1_i32 = arith.constant 1 : i32
    %5 = arith.cmpi eq, %arg0, %c1_i32 : i32
    %6 = arith.extui %5 : i1 to i32
    %c0_i32_1 = arith.constant 0 : i32
    %7 = arith.cmpi ne, %6, %c0_i32_1 : i32
    scf.if %7 {
      %c0_i32_3 = arith.constant 0 : i32
      %11 = arith.cmpi eq, %arg1, %c0_i32_3 : i32
      %12 = arith.extui %11 : i1 to i32
      %c0_i32_4 = arith.constant 0 : i32
      %13 = arith.cmpi ne, %12, %c0_i32_4 : i32
      scf.if %13 {
        %c0_32 = arith.constant 0 : index
        %c0_33 = arith.constant 0 : index
        %63 = vector.load %arg18[%c0_32, %c0_33] : memref<1x128xf32, #tpu.memory_space<vmem>>, vector<1x128xf32>
        %cst_34 = arith.constant 5.000000e-02 : f32
        %64 = vector.broadcast %cst_34 : f32 to vector<1x128xf32>
        %65 = arith.mulf %63, %64 : vector<1x128xf32>
        %c0_35 = arith.constant 0 : index
        %c0_36 = arith.constant 0 : index
        %66 = vector.load %arg19[%c0_35, %c0_36] : memref<1x128xf32, #tpu.memory_space<vmem>>, vector<1x128xf32>
        %cst_37 = arith.constant 5.000000e-02 : f32
        %67 = vector.broadcast %cst_37 : f32 to vector<1x128xf32>
        %68 = arith.mulf %66, %67 : vector<1x128xf32>
        %69 = arith.mulf %65, %65 : vector<1x128xf32>
        %70 = arith.subf %68, %69 : vector<1x128xf32>
        %cst_38 = arith.constant 0.000000e+00 : f32
        %71 = vector.broadcast %cst_38 : f32 to vector<1x128xf32>
        %72 = arith.maximumf %70, %71 : vector<1x128xf32>
        %c0_39 = arith.constant 0 : index
        %c0_40 = arith.constant 0 : index
        %73 = vector.load %arg17[%c0_39, %c0_40] : memref<1x128xf32, #tpu.memory_space<vmem>>, vector<1x128xf32>
        %74 = arith.addf %73, %65 : vector<1x128xf32>
        %c0_41 = arith.constant 0 : index
        %c0_42 = arith.constant 0 : index
        %75 = vector.load %arg5[%c0_41, %c0_42] : memref<1x128xf32, #tpu.memory_space<vmem>>, vector<1x128xf32>
        %cst_43 = arith.constant 9.99999974E-6 : f32
        %76 = vector.broadcast %cst_43 : f32 to vector<1x128xf32>
        %77 = arith.addf %72, %76 : vector<1x128xf32>
        %78 = math.rsqrt %77 : vector<1x128xf32>
        %79 = arith.mulf %75, %78 : vector<1x128xf32>
        %c0_44 = arith.constant 0 : index
        %c0_45 = arith.constant 0 : index
        %80 = vector.load %arg6[%c0_44, %c0_45] : memref<1x128xf32, #tpu.memory_space<vmem>>, vector<1x128xf32>
        %81 = arith.mulf %74, %79 : vector<1x128xf32>
        %82 = arith.subf %80, %81 : vector<1x128xf32>
        %c0_46 = arith.constant 0 : index
        %c0_47 = arith.constant 0 : index
        %83 = vector.load %arg18[%c0_46, %c0_47] : memref<1x128xf32, #tpu.memory_space<vmem>>, vector<1x128xf32>
        tpu.vector_store %arg18[%c0_46, %c0_47], %79 {strides = array<i32>} : memref<1x128xf32, #tpu.memory_space<vmem>>, vector<1x128xf32>,
        %c0_48 = arith.constant 0 : index
        %c0_49 = arith.constant 0 : index
        %84 = vector.load %arg19[%c0_48, %c0_49] : memref<1x128xf32, #tpu.memory_space<vmem>>, vector<1x128xf32>
        tpu.vector_store %arg19[%c0_48, %c0_49], %82 {strides = array<i32>} : memref<1x128xf32, #tpu.memory_space<vmem>>, vector<1x128xf32>,
      } else {
      }
      %14 = arith.index_cast %1 : i32 to index
      %c0 = arith.constant 0 : index
      %15 = vector.load %arg14[%14, %c0] : memref<32x128xbf16, #tpu.memory_space<vmem>>, vector<16x128xbf16>
      %16 = arith.extf %15 : vector<16x128xbf16> to vector<16x128xf32>
      %c0_5 = arith.constant 0 : index
      %c0_6 = arith.constant 0 : index
      %17 = vector.load %arg18[%c0_5, %c0_6] : memref<1x128xf32, #tpu.memory_space<vmem>>, vector<1x128xf32>
      %18 = vector.broadcast %17 : vector<1x128xf32> to vector<16x128xf32>
      %19 = arith.mulf %16, %18 : vector<16x128xf32>
      %c0_7 = arith.constant 0 : index
      %c0_8 = arith.constant 0 : index
      %20 = vector.load %arg19[%c0_7, %c0_8] : memref<1x128xf32, #tpu.memory_space<vmem>>, vector<1x128xf32>
      %21 = vector.broadcast %20 : vector<1x128xf32> to vector<16x128xf32>
      %22 = arith.addf %19, %21 : vector<16x128xf32>
      %cst = arith.constant 0.000000e+00 : f32
      %23 = vector.broadcast %cst : f32 to vector<16x128xf32>
      %24 = arith.cmpf oge, %22, %23 : vector<16x128xf32>
      %cst_9 = arith.constant 2.000000e-01 : f32
      %25 = vector.broadcast %cst_9 : f32 to vector<16x128xf32>
      %26 = arith.mulf %25, %22 : vector<16x128xf32>
      %27 = arith.select %24, %22, %26 : vector<16x128xi1>, vector<16x128xf32>
      %28 = arith.truncf %27 : vector<16x128xf32> to vector<16x128xbf16>
      %c0_10 = arith.constant 0 : index
      %c0_11 = arith.constant 0 : index
      %29 = vector.load %arg7[%c0_10, %c0_11] : memref<128x128xbf16, #tpu.memory_space<vmem>>, vector<128x128xbf16>
      %cst_12 = arith.constant dense<0.000000e+00> : vector<16x128xf32>
      %30 = tpu.matmul %28, %29, %cst_12 {dimension_numbers = #tpu.dot_dimension_numbers<[1], [0], [0], [1], [0, 0, 1, 1], [], []>} : vector<16x128xbf16>, vector<128x128xbf16>, vector<16x128xf32> -> vector<16x128xf32>
      %c0_13 = arith.constant 0 : index
      %c0_14 = arith.constant 0 : index
      %31 = vector.load %arg8[%c0_13, %c0_14] : memref<1x128xf32, #tpu.memory_space<vmem>>, vector<1x128xf32>
      %32 = vector.broadcast %31 : vector<1x128xf32> to vector<16x128xf32>
      %33 = arith.addf %30, %32 : vector<16x128xf32>
      %34 = arith.index_cast %1 : i32 to index
      %c0_15 = arith.constant 0 : index
      %35 = vector.load %arg15[%34, %c0_15] : memref<32x128xf32, #tpu.memory_space<vmem>>, vector<16x128xf32>
      tpu.vector_store %arg15[%34, %c0_15], %33 {strides = array<i32>} : memref<32x128xf32, #tpu.memory_space<vmem>>, vector<16x128xf32>,
      %c0_i32_16 = arith.constant 0 : i32
      %36 = arith.cmpi eq, %arg1, %c0_i32_16 : i32
      %37 = arith.extui %36 : i1 to i32
      %c0_i32_17 = arith.constant 0 : i32
      %38 = arith.cmpi ne, %37, %c0_i32_17 : i32
      scf.if %38 {
        %cst_32 = arith.constant dense<0.000000e+00> : vector<128xf32>
        %63 = vector.multi_reduction <add>, %33, %cst_32 [0] : vector<16x128xf32> to vector<128xf32>
        %64 = vector.shape_cast %63 : vector<128xf32> to vector<1x128xf32>
        %cst_33 = arith.constant 6.250000e-02 : f32
        %65 = vector.broadcast %cst_33 : f32 to vector<1x128xf32>
        %66 = arith.mulf %64, %65 : vector<1x128xf32>
        %c0_34 = arith.constant 0 : index
        %c0_35 = arith.constant 0 : index
        %67 = vector.load %arg20[%c0_34, %c0_35] : memref<1x128xf32, #tpu.memory_space<vmem>>, vector<1x128xf32>
        tpu.vector_store %arg20[%c0_34, %c0_35], %66 {strides = array<i32>} : memref<1x128xf32, #tpu.memory_space<vmem>>, vector<1x128xf32>,
        %cst_36 = arith.constant 0.000000e+00 : f32
        %68 = vector.broadcast %cst_36 : f32 to vector<1x128xf32>
        %c0_37 = arith.constant 0 : index
        %c0_38 = arith.constant 0 : index
        %69 = vector.load %arg21[%c0_37, %c0_38] : memref<1x128xf32, #tpu.memory_space<vmem>>, vector<1x128xf32>
        tpu.vector_store %arg21[%c0_37, %c0_38], %68 {strides = array<i32>} : memref<1x128xf32, #tpu.memory_space<vmem>>, vector<1x128xf32>,
        %cst_39 = arith.constant 0.000000e+00 : f32
        %70 = vector.broadcast %cst_39 : f32 to vector<1x128xf32>
        %c0_40 = arith.constant 0 : index
        %c0_41 = arith.constant 0 : index
        %71 = vector.load %arg22[%c0_40, %c0_41] : memref<1x128xf32, #tpu.memory_space<vmem>>, vector<1x128xf32>
        tpu.vector_store %arg22[%c0_40, %c0_41], %70 {strides = array<i32>} : memref<1x128xf32, #tpu.memory_space<vmem>>, vector<1x128xf32>,
      } else {
      }
      %c0_18 = arith.constant 0 : index
      %c0_19 = arith.constant 0 : index
      %39 = vector.load %arg20[%c0_18, %c0_19] : memref<1x128xf32, #tpu.memory_space<vmem>>, vector<1x128xf32>
      %40 = vector.broadcast %39 : vector<1x128xf32> to vector<16x128xf32>
      %41 = arith.subf %33, %40 : vector<16x128xf32>
      %c16_i32_20 = arith.constant 16 : i32
      %42 = arith.muli %arg1, %c16_i32_20 : i32
      %43 = tpu.iota {dimensions = array<i32: 0>} : vector<16x1xi32>
      %44 = vector.broadcast %42 : i32 to vector<16x1xi32>
      %45 = arith.addi %44, %43 : vector<16x1xi32>
      %c20_i32 = arith.constant 20 : i32
      %46 = vector.broadcast %c20_i32 : i32 to vector<16x1xi32>
      %47 = arith.cmpi slt, %45, %46 : vector<16x1xi32>
      %cst_21 = arith.constant 0.000000e+00 : f32
      %48 = vector.shape_cast %47 : vector<16x1xi1> to vector<16x1xi1>
      %49 = vector.broadcast %48 : vector<16x1xi1> to vector<16x128xi1>
      %50 = vector.broadcast %cst_21 : f32 to vector<16x128xf32>
      %51 = arith.select %49, %41, %50 : vector<16x128xi1>, vector<16x128xf32>
      %c0_22 = arith.constant 0 : index
      %c0_23 = arith.constant 0 : index
      %52 = vector.load %arg21[%c0_22, %c0_23] : memref<1x128xf32, #tpu.memory_space<vmem>>, vector<1x128xf32>
      %cst_24 = arith.constant dense<0.000000e+00> : vector<128xf32>
      %53 = vector.multi_reduction <add>, %51, %cst_24 [0] : vector<16x128xf32> to vector<128xf32>
      %54 = vector.shape_cast %53 : vector<128xf32> to vector<1x128xf32>
      %55 = arith.addf %52, %54 : vector<1x128xf32>
      %c0_25 = arith.constant 0 : index
      %c0_26 = arith.constant 0 : index
      %56 = vector.load %arg21[%c0_25, %c0_26] : memref<1x128xf32, #tpu.memory_space<vmem>>, vector<1x128xf32>
      tpu.vector_store %arg21[%c0_25, %c0_26], %55 {strides = array<i32>} : memref<1x128xf32, #tpu.memory_space<vmem>>, vector<1x128xf32>,
      %c0_27 = arith.constant 0 : index
      %c0_28 = arith.constant 0 : index
      %57 = vector.load %arg22[%c0_27, %c0_28] : memref<1x128xf32, #tpu.memory_space<vmem>>, vector<1x128xf32>
      %58 = arith.mulf %51, %51 : vector<16x128xf32>
      %cst_29 = arith.constant dense<0.000000e+00> : vector<128xf32>
      %59 = vector.multi_reduction <add>, %58, %cst_29 [0] : vector<16x128xf32> to vector<128xf32>
      %60 = vector.shape_cast %59 : vector<128xf32> to vector<1x128xf32>
      %61 = arith.addf %57, %60 : vector<1x128xf32>
      %c0_30 = arith.constant 0 : index
      %c0_31 = arith.constant 0 : index
      %62 = vector.load %arg22[%c0_30, %c0_31] : memref<1x128xf32, #tpu.memory_space<vmem>>, vector<1x128xf32>
      tpu.vector_store %arg22[%c0_30, %c0_31], %61 {strides = array<i32>} : memref<1x128xf32, #tpu.memory_space<vmem>>, vector<1x128xf32>,
    } else {
    }
    %c2_i32 = arith.constant 2 : i32
    %8 = arith.cmpi eq, %arg0, %c2_i32 : i32
    %9 = arith.extui %8 : i1 to i32
    %c0_i32_2 = arith.constant 0 : i32
    %10 = arith.cmpi ne, %9, %c0_i32_2 : i32
    scf.if %10 {
      %c0_i32_3 = arith.constant 0 : i32
      %11 = arith.cmpi eq, %arg1, %c0_i32_3 : i32
      %12 = arith.extui %11 : i1 to i32
      %c0_i32_4 = arith.constant 0 : i32
      %13 = arith.cmpi ne, %12, %c0_i32_4 : i32
      scf.if %13 {
        %c0_13 = arith.constant 0 : index
        %c0_14 = arith.constant 0 : index
        %32 = vector.load %arg21[%c0_13, %c0_14] : memref<1x128xf32, #tpu.memory_space<vmem>>, vector<1x128xf32>
        %cst_15 = arith.constant 5.000000e-02 : f32
        %33 = vector.broadcast %cst_15 : f32 to vector<1x128xf32>
        %34 = arith.mulf %32, %33 : vector<1x128xf32>
        %c0_16 = arith.constant 0 : index
        %c0_17 = arith.constant 0 : index
        %35 = vector.load %arg22[%c0_16, %c0_17] : memref<1x128xf32, #tpu.memory_space<vmem>>, vector<1x128xf32>
        %cst_18 = arith.constant 5.000000e-02 : f32
        %36 = vector.broadcast %cst_18 : f32 to vector<1x128xf32>
        %37 = arith.mulf %35, %36 : vector<1x128xf32>
        %38 = arith.mulf %34, %34 : vector<1x128xf32>
        %39 = arith.subf %37, %38 : vector<1x128xf32>
        %cst_19 = arith.constant 0.000000e+00 : f32
        %40 = vector.broadcast %cst_19 : f32 to vector<1x128xf32>
        %41 = arith.maximumf %39, %40 : vector<1x128xf32>
        %c0_20 = arith.constant 0 : index
        %c0_21 = arith.constant 0 : index
        %42 = vector.load %arg20[%c0_20, %c0_21] : memref<1x128xf32, #tpu.memory_space<vmem>>, vector<1x128xf32>
        %43 = arith.addf %42, %34 : vector<1x128xf32>
        %c0_22 = arith.constant 0 : index
        %c0_23 = arith.constant 0 : index
        %44 = vector.load %arg9[%c0_22, %c0_23] : memref<1x128xf32, #tpu.memory_space<vmem>>, vector<1x128xf32>
        %cst_24 = arith.constant 9.99999974E-6 : f32
        %45 = vector.broadcast %cst_24 : f32 to vector<1x128xf32>
        %46 = arith.addf %41, %45 : vector<1x128xf32>
        %47 = math.rsqrt %46 : vector<1x128xf32>
        %48 = arith.mulf %44, %47 : vector<1x128xf32>
        %c0_25 = arith.constant 0 : index
        %c0_26 = arith.constant 0 : index
        %49 = vector.load %arg10[%c0_25, %c0_26] : memref<1x128xf32, #tpu.memory_space<vmem>>, vector<1x128xf32>
        %50 = arith.mulf %43, %48 : vector<1x128xf32>
        %51 = arith.subf %49, %50 : vector<1x128xf32>
        %c0_27 = arith.constant 0 : index
        %c0_28 = arith.constant 0 : index
        %52 = vector.load %arg21[%c0_27, %c0_28] : memref<1x128xf32, #tpu.memory_space<vmem>>, vector<1x128xf32>
        tpu.vector_store %arg21[%c0_27, %c0_28], %48 {strides = array<i32>} : memref<1x128xf32, #tpu.memory_space<vmem>>, vector<1x128xf32>,
        %c0_29 = arith.constant 0 : index
        %c0_30 = arith.constant 0 : index
        %53 = vector.load %arg22[%c0_29, %c0_30] : memref<1x128xf32, #tpu.memory_space<vmem>>, vector<1x128xf32>
        tpu.vector_store %arg22[%c0_29, %c0_30], %51 {strides = array<i32>} : memref<1x128xf32, #tpu.memory_space<vmem>>, vector<1x128xf32>,
      } else {
      }
      %14 = arith.index_cast %1 : i32 to index
      %c0 = arith.constant 0 : index
      %15 = vector.load %arg16[%14, %c0] : memref<32x128xbf16, #tpu.memory_space<vmem>>, vector<16x128xbf16>
      %16 = arith.extf %15 : vector<16x128xbf16> to vector<16x128xf32>
      %17 = arith.index_cast %1 : i32 to index
      %c0_5 = arith.constant 0 : index
      %18 = vector.load %arg15[%17, %c0_5] : memref<32x128xf32, #tpu.memory_space<vmem>>, vector<16x128xf32>
      %c0_6 = arith.constant 0 : index
      %c0_7 = arith.constant 0 : index
      %19 = vector.load %arg21[%c0_6, %c0_7] : memref<1x128xf32, #tpu.memory_space<vmem>>, vector<1x128xf32>
      %20 = vector.broadcast %19 : vector<1x128xf32> to vector<16x128xf32>
      %21 = arith.mulf %18, %20 : vector<16x128xf32>
      %22 = arith.addf %16, %21 : vector<16x128xf32>
      %c0_8 = arith.constant 0 : index
      %c0_9 = arith.constant 0 : index
      %23 = vector.load %arg22[%c0_8, %c0_9] : memref<1x128xf32, #tpu.memory_space<vmem>>, vector<1x128xf32>
      %24 = vector.broadcast %23 : vector<1x128xf32> to vector<16x128xf32>
      %25 = arith.addf %22, %24 : vector<16x128xf32>
      %cst = arith.constant 0.000000e+00 : f32
      %26 = vector.broadcast %cst : f32 to vector<16x128xf32>
      %27 = arith.cmpf oge, %25, %26 : vector<16x128xf32>
      %cst_10 = arith.constant 2.000000e-01 : f32
      %28 = vector.broadcast %cst_10 : f32 to vector<16x128xf32>
      %29 = arith.mulf %28, %25 : vector<16x128xf32>
      %30 = arith.select %27, %25, %29 : vector<16x128xi1>, vector<16x128xf32>
      %c0_11 = arith.constant 0 : index
      %c0_12 = arith.constant 0 : index
      %31 = vector.load %arg13[%c0_11, %c0_12] : memref<16x128xf32, #tpu.memory_space<vmem>>, vector<16x128xf32>
      tpu.vector_store %arg13[%c0_11, %c0_12], %30 {strides = array<i32>} : memref<16x128xf32, #tpu.memory_space<vmem>>, vector<16x128xf32>,
    } else {
    }
    return
  }
  func.func @transform_0(%arg0: i32, %arg1: i32) -> (i32, i32) {
    %c0_i32 = arith.constant 0 : i32
    %0 = arith.cmpi eq, %arg0, %c0_i32 : i32
    %c0_i32_0 = arith.constant 0 : i32
    %1 = arith.select %0, %arg1, %c0_i32_0 : i32
    %c0_i32_1 = arith.constant 0 : i32
    %c0_i32_2 = arith.constant 0 : i32
    return %1, %c0_i32_1 : i32, i32
  }
  func.func @transform_1(%arg0: i32, %arg1: i32) -> (i32, i32) {
    %c0_i32 = arith.constant 0 : i32
    %c0_i32_0 = arith.constant 0 : i32
    %c0_i32_1 = arith.constant 0 : i32
    return %c0_i32, %c0_i32_0 : i32, i32
  }
  func.func @transform_2(%arg0: i32, %arg1: i32) -> (i32, i32) {
    %c0_i32 = arith.constant 0 : i32
    %c0_i32_0 = arith.constant 0 : i32
    %c0_i32_1 = arith.constant 0 : i32
    return %c0_i32, %c0_i32_0 : i32, i32
  }
  func.func @transform_3(%arg0: i32, %arg1: i32) -> (i32, i32) {
    %c0_i32 = arith.constant 0 : i32
    %c0_i32_0 = arith.constant 0 : i32
    %c0_i32_1 = arith.constant 0 : i32
    return %c0_i32, %c0_i32_0 : i32, i32
  }
  func.func @transform_4(%arg0: i32, %arg1: i32) -> (i32, i32) {
    %c0_i32 = arith.constant 0 : i32
    %c0_i32_0 = arith.constant 0 : i32
    %c0_i32_1 = arith.constant 0 : i32
    return %c0_i32, %c0_i32_0 : i32, i32
  }
  func.func @transform_5(%arg0: i32, %arg1: i32) -> (i32, i32) {
    %c0_i32 = arith.constant 0 : i32
    %c0_i32_0 = arith.constant 0 : i32
    %c0_i32_1 = arith.constant 0 : i32
    return %c0_i32, %c0_i32_0 : i32, i32
  }
  func.func @transform_6(%arg0: i32, %arg1: i32) -> (i32, i32) {
    %c0_i32 = arith.constant 0 : i32
    %c0_i32_0 = arith.constant 0 : i32
    %c0_i32_1 = arith.constant 0 : i32
    return %c0_i32, %c0_i32_0 : i32, i32
  }
  func.func @transform_7(%arg0: i32, %arg1: i32) -> (i32, i32) {
    %c0_i32 = arith.constant 0 : i32
    %c0_i32_0 = arith.constant 0 : i32
    %c0_i32_1 = arith.constant 0 : i32
    return %c0_i32, %c0_i32_0 : i32, i32
  }
  func.func @transform_8(%arg0: i32, %arg1: i32) -> (i32, i32) {
    %c0_i32 = arith.constant 0 : i32
    %c0_i32_0 = arith.constant 0 : i32
    %c0_i32_1 = arith.constant 0 : i32
    return %c0_i32, %c0_i32_0 : i32, i32
  }
  func.func @transform_9(%arg0: i32, %arg1: i32) -> (i32, i32) {
    %c0_i32 = arith.constant 0 : i32
    %c0_i32_0 = arith.constant 0 : i32
    %c0_i32_1 = arith.constant 0 : i32
    return %c0_i32, %c0_i32_0 : i32, i32
  }
  func.func @transform_10(%arg0: i32, %arg1: i32) -> (i32, i32) {
    %c0_i32 = arith.constant 0 : i32
    %c0_i32_0 = arith.constant 0 : i32
    %c0_i32_1 = arith.constant 0 : i32
    return %c0_i32, %c0_i32_0 : i32, i32
  }
  func.func @transform_11(%arg0: i32, %arg1: i32) -> (i32, i32) {
    %c2_i32 = arith.constant 2 : i32
    %0 = arith.cmpi eq, %arg0, %c2_i32 : i32
    %c0_i32 = arith.constant 0 : i32
    %1 = arith.select %0, %arg1, %c0_i32 : i32
    %c0_i32_0 = arith.constant 0 : i32
    %c0_i32_1 = arith.constant 0 : i32
    return %1, %c0_i32_0 : i32, i32
  }
}

</mosaic_0001>

<llo_original>
// kernel: tpu_custom_call.1
$region0: #{tpu_custom_call.1}
  #allocation0 [shape = 'u32[]', space=smem, size = 0x4, offset = 0x4, fixed_abs, tag = 'smem constant byte address 0x4 - core index']
  #allocation1 [shape = 'u32[144,128]{1,0:T(1,128)}', space=vmem, size = 0x12000, scoped, tag = 'internal scratch']
  #allocation2 [shape = 'bf16[32,128]{1,0:T(16,128)(2,1)}', space=vmem, size = 0x2000, scoped, tag = 'scratch operand']
  #allocation3 [shape = 'f32[32,128]{1,0:T(8,128)}', space=vmem, size = 0x4000, scoped, tag = 'scratch operand']
  #allocation4 [shape = 'bf16[32,128]{1,0:T(16,128)(2,1)}', space=vmem, size = 0x2000, scoped, tag = 'scratch operand']
  #allocation5 [shape = 'f32[1,128]{1,0:T(1,128)}', space=vmem, size = 0x200, scoped, tag = 'scratch operand']
  #allocation6 [shape = 'f32[1,128]{1,0:T(1,128)}', space=vmem, size = 0x200, scoped, tag = 'scratch operand']
  #allocation7 [shape = 'f32[1,128]{1,0:T(1,128)}', space=vmem, size = 0x200, scoped, tag = 'scratch operand']
  #allocation8 [shape = 'f32[1,128]{1,0:T(1,128)}', space=vmem, size = 0x200, scoped, tag = 'scratch operand']
  #allocation9 [shape = 'f32[1,128]{1,0:T(1,128)}', space=vmem, size = 0x200, scoped, tag = 'scratch operand']
  #allocation10 [shape = 'f32[1,128]{1,0:T(1,128)}', space=vmem, size = 0x200, scoped, tag = 'scratch operand']
  %s0 = inlined_call_operand.hbm [shape: bf16[32,32], index: 0, kind: input, shape index: {}]
  %s1 = inlined_call_operand.hbm [shape: bf16[32,128], index: 1, kind: input, shape index: {}]
  %s2 = inlined_call_operand.vmem [shape: f32[1,128], index: 2, kind: input, shape index: {}]
  %s3 = inlined_call_operand.vmem [shape: f32[1,128], index: 3, kind: input, shape index: {}]
  %s4 = inlined_call_operand.vmem [shape: f32[1,128], index: 4, kind: input, shape index: {}]
  %s5 = inlined_call_operand.hbm [shape: bf16[128,128], index: 5, kind: input, shape index: {}]
  %s6 = inlined_call_operand.vmem [shape: f32[1,128], index: 6, kind: input, shape index: {}]
  %s7 = inlined_call_operand.vmem [shape: f32[1,128], index: 7, kind: input, shape index: {}]
  %s8 = inlined_call_operand.vmem [shape: f32[1,128], index: 8, kind: input, shape index: {}]
  %s9 = inlined_call_operand.vmem [shape: bf16[32,128], index: 9, kind: input, shape index: {}]
  %s10 = inlined_call_operand.vmem [shape: f32[1,128], index: 10, kind: input, shape index: {}]
  %s11 = inlined_call_operand.hbm [shape: f32[32,128], index: 11, kind: output, shape index: {}]
  %s12 = sld [smem:[#allocation0]]
  $region117: #{tpu_custom_call.1} parent=0
    _
  %s14 = ssub.s32 1, %s12
  %s15 = scalar_select 0, %s14, %s12
  $region1: #{tpu_custom_call.1} parent=0
    #allocation11 [shape = 'u8[8192]{0}', space=vmem, size = 0x2000, scoped, tag = 'input window, operand 0']
    #allocation12 [shape = 's32[2]{0}', space=sflag, size = 0x8, scoped, tag = 'scoped memory for tpu_custom_call.1']
    #allocation13 [shape = 's32[2]{0}', space=sflag, size = 0x8, scoped, tag = 'scoped memory for tpu_custom_call.1']
    #allocation14 [shape = 'u8[8192]{0}', space=vmem, size = 0x2000, scoped, tag = 'input window, operand 1, single buffered']
    #allocation15 [shape = 's32[1]{0}', space=sflag, size = 0x4, scoped, tag = 'scoped memory for tpu_custom_call.1']
    #allocation16 [shape = 'u8[32768]{0}', space=vmem, size = 0x8000, scoped, tag = 'input window, operand 5, single buffered']
    #allocation17 [shape = 'u8[16384]{0}', space=vmem, size = 0x4000, scoped, tag = 'output window, operand 0']
    %16 = vsyncpa [#allocation12], 0
    %s17 = scalar_lea.sflag [#allocation12], 1
    %18 = vsyncpa %s17, 0
    %19 = vsyncpa [#allocation15], 0
    %20 = vsyncpa [#allocation13], 0
    %s21 = scalar_lea.sflag [#allocation13], 1
    %22 = vsyncpa %s21, 0
    loop: start=0, step=1, limit=8
    $region2: #{tpu_custom_call.1} parent=1 // loop_pre_header
      _
    $region3: #{tpu_custom_call.1} parent=1 // loop_header
      %s24 = sphi 0, %s28
      %p25 = scmp.ge.s32.totalorder %s24, 8
      %s31 = sphi 0, %s43
      %s32 = sphi 0, %s39
      %s33 = sphi 0, %s31
      %s34 = sphi 0, %s32
      %s35 = sphi 0, %s33
      %s36 = sphi 0, %s34
      %s50 = sphi 0, %s52
      %s53 = sphi 0, %s50
      %s54 = sphi 0, %s53
      %s70 = sphi 0, %s54
      %s74 = sphi 0, %s74
      %s76 = sphi 0, %s74
      %s77 = sphi 0, %s76
      %s91 = sphi 0, %s77
      %s95 = sphi 0, %s95
      %s97 = sphi 0, %s95
      %s98 = sphi 0, %s97
      %s112 = sphi 0, %s98
      %s116 = sphi 0, %s116
      %s118 = sphi 0, %s116
      %s119 = sphi 0, %s118
      %s133 = sphi 0, %s119
      %s137 = sphi 0, %s137
      %s139 = sphi 0, %s137
      %s140 = sphi 0, %s139
      %s154 = sphi 0, %s140
      %s158 = sphi 0, %s158
      %s160 = sphi 0, %s158
      %s161 = sphi 0, %s160
      %s175 = sphi 0, %s161
      %s179 = sphi 0, %s179
      %s181 = sphi 0, %s179
      %s182 = sphi 0, %s181
      %s196 = sphi 0, %s182
      %s200 = sphi 0, %s200
      %s202 = sphi 0, %s200
      %s203 = sphi 0, %s202
      %s217 = sphi 0, %s203
      %s221 = sphi 0, %s221
      %s223 = sphi 0, %s221
      %s224 = sphi 0, %s223
      %s238 = sphi 0, %s224
      %s242 = sphi 0, %s242
      %s244 = sphi 0, %s242
      %s245 = sphi 0, %s244
      %s259 = sphi 0, %s245
      %s263 = sphi 0, %s263
      %s265 = sphi 0, %s263
      %s266 = sphi 0, %s265
      %s280 = sphi 0, %s266
      %s290 = sphi 0, %s292
      %s293 = sphi 0, %s290
      %s294 = sphi 0, %s293
      %s310 = sphi 0, %s294
    $region4: #{tpu_custom_call.1} parent=1 // loop_header_branch
      %27 = sbr.rel (%p25) target = $region8
    $region5: #{tpu_custom_call.1} parent=1 // loop_body
      %s29 = ssub.s32 %s24, 1
      %s30 = ssub.s32 %s24, 2
      %s37 = sadd.s32 1, %s32
      %p38 = scmp.ge.s32.totalorder %s37, 2
      %s39 = scalar_select %p38, 0, %s37
      %s40 = sadd.s32 1, %s31
      %s41 = scalar_select %p38, %s40, %s31
      %p42 = scmp.ge.s32.totalorder %s41, 3
      %s43 = scalar_select %p42, 0, %s41
      %p44 = scmp.eq.s32.totalorder %s31, 0
      %s45 = scalar_select %p44, %s32, 0
      %p46 = scmp.eq.s32.totalorder %s43, 0
      %s47 = scalar_select %p46, %s39, 0
      %s48 = ssub.s32 %s45, %s47
      %p49 = scmp.eq.s32.totalorder %s48, 0
      %s51 = sadd.s32 %s50, 1
      %s52 = scalar_select %p49, %s50, %s51
      %p55 = pneg %p49
      %p56 = scmp.eq.s32.totalorder %s24, 5
      %p57 = por %p55, %p56
      %p58 = scmp.ne.s32.totalorder %s50, %s53
      %p59 = scmp.eq.s32.totalorder %s24, 0
      %p60 = por %p58, %p59
      %p61 = scmp.ne.s32.totalorder %s50, %s53
      %p62 = scmp.eq.s32.totalorder %s29, 5
      %p63 = por %p61, %p62
      %p64 = scmp.ne.s32.totalorder %s53, %s54
      %p65 = scmp.eq.s32.totalorder %s29, 0
      %p66 = por %p64, %p65
      %p67 = scmp.ne.s32.totalorder %s53, %s54
      %p68 = scmp.eq.s32.totalorder %s30, 5
      %p69 = por %p67, %p68
      %p71 = scmp.ne.s32.totalorder %s54, %s70
      %p72 = scmp.eq.s32.totalorder %s30, 0
      %p73 = por %p71, %p72
      %s75 = sadd.s32 %s74, 1
      %p78 = scmp.eq.s32.totalorder %s24, 5
      %p79 = scmp.ne.s32.totalorder %s74, %s76
      %p80 = scmp.eq.s32.totalorder %s24, 0
      %p81 = por %p79, %p80
      %p82 = scmp.ne.s32.totalorder %s74, %s76
      %p83 = scmp.eq.s32.totalorder %s29, 5
      %p84 = por %p82, %p83
      %p85 = scmp.ne.s32.totalorder %s76, %s77
      %p86 = scmp.eq.s32.totalorder %s29, 0
      %p87 = por %p85, %p86
      %p88 = scmp.ne.s32.totalorder %s76, %s77
      %p89 = scmp.eq.s32.totalorder %s30, 5
      %p90 = por %p88, %p89
      %p92 = scmp.ne.s32.totalorder %s77, %s91
      %p93 = scmp.eq.s32.totalorder %s30, 0
      %p94 = por %p92, %p93
      %s96 = sadd.s32 %s95, 1
      %p99 = scmp.eq.s32.totalorder %s24, 5
      %p100 = scmp.ne.s32.totalorder %s95, %s97
      %p101 = scmp.eq.s32.totalorder %s24, 0
      %p102 = por %p100, %p101
      %p103 = scmp.ne.s32.totalorder %s95, %s97
      %p104 = scmp.eq.s32.totalorder %s29, 5
      %p105 = por %p103, %p104
      %p106 = scmp.ne.s32.totalorder %s97, %s98
      %p107 = scmp.eq.s32.totalorder %s29, 0
      %p108 = por %p106, %p107
      %p109 = scmp.ne.s32.totalorder %s97, %s98
      %p110 = scmp.eq.s32.totalorder %s30, 5
      %p111 = por %p109, %p110
      %p113 = scmp.ne.s32.totalorder %s98, %s112
      %p114 = scmp.eq.s32.totalorder %s30, 0
      %p115 = por %p113, %p114
      %s117 = sadd.s32 %s116, 1
      %p120 = scmp.eq.s32.totalorder %s24, 5
      %p121 = scmp.ne.s32.totalorder %s116, %s118
      %p122 = scmp.eq.s32.totalorder %s24, 0
      %p123 = por %p121, %p122
      %p124 = scmp.ne.s32.totalorder %s116, %s118
      %p125 = scmp.eq.s32.totalorder %s29, 5
      %p126 = por %p124, %p125
      %p127 = scmp.ne.s32.totalorder %s118, %s119
      %p128 = scmp.eq.s32.totalorder %s29, 0
      %p129 = por %p127, %p128
      %p130 = scmp.ne.s32.totalorder %s118, %s119
      %p131 = scmp.eq.s32.totalorder %s30, 5
      %p132 = por %p130, %p131
      %p134 = scmp.ne.s32.totalorder %s119, %s133
      %p135 = scmp.eq.s32.totalorder %s30, 0
      %p136 = por %p134, %p135
      %s138 = sadd.s32 %s137, 1
      %p141 = scmp.eq.s32.totalorder %s24, 5
      %p142 = scmp.ne.s32.totalorder %s137, %s139
      %p143 = scmp.eq.s32.totalorder %s24, 0
      %p144 = por %p142, %p143
      %p145 = scmp.ne.s32.totalorder %s137, %s139
      %p146 = scmp.eq.s32.totalorder %s29, 5
      %p147 = por %p145, %p146
      %p148 = scmp.ne.s32.totalorder %s139, %s140
      %p149 = scmp.eq.s32.totalorder %s29, 0
      %p150 = por %p148, %p149
      %p151 = scmp.ne.s32.totalorder %s139, %s140
      %p152 = scmp.eq.s32.totalorder %s30, 5
      %p153 = por %p151, %p152
      %p155 = scmp.ne.s32.totalorder %s140, %s154
      %p156 = scmp.eq.s32.totalorder %s30, 0
      %p157 = por %p155, %p156
      %s159 = sadd.s32 %s158, 1
      %p162 = scmp.eq.s32.totalorder %s24, 5
      %p163 = scmp.ne.s32.totalorder %s158, %s160
      %p164 = scmp.eq.s32.totalorder %s24, 0
      %p165 = por %p163, %p164
      %p166 = scmp.ne.s32.totalorder %s158, %s160
      %p167 = scmp.eq.s32.totalorder %s29, 5
      %p168 = por %p166, %p167
      %p169 = scmp.ne.s32.totalorder %s160, %s161
      %p170 = scmp.eq.s32.totalorder %s29, 0
      %p171 = por %p169, %p170
      %p172 = scmp.ne.s32.totalorder %s160, %s161
      %p173 = scmp.eq.s32.totalorder %s30, 5
      %p174 = por %p172, %p173
      %p176 = scmp.ne.s32.totalorder %s161, %s175
      %p177 = scmp.eq.s32.totalorder %s30, 0
      %p178 = por %p176, %p177
      %s180 = sadd.s32 %s179, 1
      %p183 = scmp.eq.s32.totalorder %s24, 5
      %p184 = scmp.ne.s32.totalorder %s179, %s181
      %p185 = scmp.eq.s32.totalorder %s24, 0
      %p186 = por %p184, %p185
      %p187 = scmp.ne.s32.totalorder %s179, %s181
      %p188 = scmp.eq.s32.totalorder %s29, 5
      %p189 = por %p187, %p188
      %p190 = scmp.ne.s32.totalorder %s181, %s182
      %p191 = scmp.eq.s32.totalorder %s29, 0
      %p192 = por %p190, %p191
      %p193 = scmp.ne.s32.totalorder %s181, %s182
      %p194 = scmp.eq.s32.totalorder %s30, 5
      %p195 = por %p193, %p194
      %p197 = scmp.ne.s32.totalorder %s182, %s196
      %p198 = scmp.eq.s32.totalorder %s30, 0
      %p199 = por %p197, %p198
      %s201 = sadd.s32 %s200, 1
      %p204 = scmp.eq.s32.totalorder %s24, 5
      %p205 = scmp.ne.s32.totalorder %s200, %s202
      %p206 = scmp.eq.s32.totalorder %s24, 0
      %p207 = por %p205, %p206
      %p208 = scmp.ne.s32.totalorder %s200, %s202
      %p209 = scmp.eq.s32.totalorder %s29, 5
      %p210 = por %p208, %p209
      %p211 = scmp.ne.s32.totalorder %s202, %s203
      %p212 = scmp.eq.s32.totalorder %s29, 0
      %p213 = por %p211, %p212
      %p214 = scmp.ne.s32.totalorder %s202, %s203
      %p215 = scmp.eq.s32.totalorder %s30, 5
      %p216 = por %p214, %p215
      %p218 = scmp.ne.s32.totalorder %s203, %s217
      %p219 = scmp.eq.s32.totalorder %s30, 0
      %p220 = por %p218, %p219
      %s222 = sadd.s32 %s221, 1
      %p225 = scmp.eq.s32.totalorder %s24, 5
      %p226 = scmp.ne.s32.totalorder %s221, %s223
      %p227 = scmp.eq.s32.totalorder %s24, 0
      %p228 = por %p226, %p227
      %p229 = scmp.ne.s32.totalorder %s221, %s223
      %p230 = scmp.eq.s32.totalorder %s29, 5
      %p231 = por %p229, %p230
      %p232 = scmp.ne.s32.totalorder %s223, %s224
      %p233 = scmp.eq.s32.totalorder %s29, 0
      %p234 = por %p232, %p233
      %p235 = scmp.ne.s32.totalorder %s223, %s224
      %p236 = scmp.eq.s32.totalorder %s30, 5
      %p237 = por %p235, %p236
      %p239 = scmp.ne.s32.totalorder %s224, %s238
      %p240 = scmp.eq.s32.totalorder %s30, 0
      %p241 = por %p239, %p240
      %s243 = sadd.s32 %s242, 1
      %p246 = scmp.eq.s32.totalorder %s24, 5
      %p247 = scmp.ne.s32.totalorder %s242, %s244
      %p248 = scmp.eq.s32.totalorder %s24, 0
      %p249 = por %p247, %p248
      %p250 = scmp.ne.s32.totalorder %s242, %s244
      %p251 = scmp.eq.s32.totalorder %s29, 5
      %p252 = por %p250, %p251
      %p253 = scmp.ne.s32.totalorder %s244, %s245
      %p254 = scmp.eq.s32.totalorder %s29, 0
      %p255 = por %p253, %p254
      %p256 = scmp.ne.s32.totalorder %s244, %s245
      %p257 = scmp.eq.s32.totalorder %s30, 5
      %p258 = por %p256, %p257
      %p260 = scmp.ne.s32.totalorder %s245, %s259
      %p261 = scmp.eq.s32.totalorder %s30, 0
      %p262 = por %p260, %p261
      %s264 = sadd.s32 %s263, 1
      %p267 = scmp.eq.s32.totalorder %s24, 5
      %p268 = scmp.ne.s32.totalorder %s263, %s265
      %p269 = scmp.eq.s32.totalorder %s24, 0
      %p270 = por %p268, %p269
      %p271 = scmp.ne.s32.totalorder %s263, %s265
      %p272 = scmp.eq.s32.totalorder %s29, 5
      %p273 = por %p271, %p272
      %p274 = scmp.ne.s32.totalorder %s265, %s266
      %p275 = scmp.eq.s32.totalorder %s29, 0
      %p276 = por %p274, %p275
      %p277 = scmp.ne.s32.totalorder %s265, %s266
      %p278 = scmp.eq.s32.totalorder %s30, 5
      %p279 = por %p277, %p278
      %p281 = scmp.ne.s32.totalorder %s266, %s280
      %p282 = scmp.eq.s32.totalorder %s30, 0
      %p283 = por %p281, %p282
      %p284 = scmp.eq.s32.totalorder %s31, 2
      %s285 = scalar_select %p284, %s32, 0
      %p286 = scmp.eq.s32.totalorder %s43, 2
      %s287 = scalar_select %p286, %s39, 0
      %s288 = ssub.s32 %s285, %s287
      %p289 = scmp.eq.s32.totalorder %s288, 0
      %s291 = sadd.s32 %s290, 1
      %s292 = scalar_select %p289, %s290, %s291
      %p295 = pneg %p289
      %p296 = scmp.eq.s32.totalorder %s24, 5
      %p297 = por %p295, %p296
      %p298 = scmp.ne.s32.totalorder %s290, %s293
      %p299 = scmp.eq.s32.totalorder %s24, 0
      %p300 = por %p298, %p299
      %p301 = scmp.ne.s32.totalorder %s290, %s293
      %p302 = scmp.eq.s32.totalorder %s29, 5
      %p303 = por %p301, %p302
      %p304 = scmp.ne.s32.totalorder %s293, %s294
      %p305 = scmp.eq.s32.totalorder %s29, 0
      %p306 = por %p304, %p305
      %p307 = scmp.ne.s32.totalorder %s293, %s294
      %p308 = scmp.eq.s32.totalorder %s30, 5
      %p309 = por %p307, %p308
      %p311 = scmp.ne.s32.totalorder %s294, %s310
      %p312 = scmp.eq.s32.totalorder %s30, 0
      %p313 = por %p311, %p312
      %p314 = scmp.le.s32.totalorder 1, %s24
      %p315 = scmp.lt.s32.totalorder %s24, 7
      %p316 = pnand %p314, %p315
      %p317 = pneg %p316
      // Predicated region
      $region9: #{tpu_custom_call.1} parent=5 // pred_check
        _
      $region10: #{tpu_custom_call.1} parent=5 // pred_check_branch
        %319 = sbr.rel (%p316) target = $region12
      $region11: #{tpu_custom_call.1} parent=5 // pred_region
        %s320 = ssub.s32 %s24, 1
        // Predicated region
        $region13: #{tpu_custom_call.1} parent=11 // pred_check
          %p321 = pneg %p87
        $region14: #{tpu_custom_call.1} parent=11 // pred_check_branch
          %323 = sbr.rel (%p321) target = $region16
        $region15: #{tpu_custom_call.1} parent=11 // pred_region
          %s325 = ssub.s32 256, 256
          %326 = vsyncadd [#allocation15], %s325
          %s327 = sshll.u32 [#allocation14], 4
          %s328 = int_to_ptr.vmem [resolvable:$true] %s327
          %333 = dma.hbm_to_vmem [thread:$0]  %s1, 256, %s328, [#allocation15], 64, 64, 4
        $region16: #{tpu_custom_call.1} parent=11 // pred_fallthru
          _
        // Predicated region
        $region17: #{tpu_custom_call.1} parent=11 // pred_check
          %p334 = pneg %p108
        $region18: #{tpu_custom_call.1} parent=11 // pred_check_branch
          %336 = sbr.rel (%p334) target = $region20
        $region19: #{tpu_custom_call.1} parent=11 // pred_region
          _
        $region20: #{tpu_custom_call.1} parent=11 // pred_fallthru
          _
        // Predicated region
        $region21: #{tpu_custom_call.1} parent=11 // pred_check
          %p337 = pneg %p129
        $region22: #{tpu_custom_call.1} parent=11 // pred_check_branch
          %339 = sbr.rel (%p337) target = $region24
        $region23: #{tpu_custom_call.1} parent=11 // pred_region
          _
        $region24: #{tpu_custom_call.1} parent=11 // pred_fallthru
          _
        // Predicated region
        $region25: #{tpu_custom_call.1} parent=11 // pred_check
          %p340 = pneg %p150
        $region26: #{tpu_custom_call.1} parent=11 // pred_check_branch
          %342 = sbr.rel (%p340) target = $region28
        $region27: #{tpu_custom_call.1} parent=11 // pred_region
          _
        $region28: #{tpu_custom_call.1} parent=11 // pred_fallthru
          _
        // Predicated region
        $region29: #{tpu_custom_call.1} parent=11 // pred_check
          %p343 = pneg %p171
        $region30: #{tpu_custom_call.1} parent=11 // pred_check_branch
          %345 = sbr.rel (%p343) target = $region32
        $region31: #{tpu_custom_call.1} parent=11 // pred_region
          %s347 = ssub.s32 1024, 1024
          %348 = vsyncadd [#allocation15], %s347
          %s349 = sshll.u32 [#allocation16], 4
          %s350 = int_to_ptr.vmem [resolvable:$true] %s349
          %355 = dma.hbm_to_vmem [thread:$0]  %s5, 1024, %s350, [#allocation15], 64, 64, 4
        $region32: #{tpu_custom_call.1} parent=11 // pred_fallthru
          _
        // Predicated region
        $region33: #{tpu_custom_call.1} parent=11 // pred_check
          %p356 = pneg %p192
        $region34: #{tpu_custom_call.1} parent=11 // pred_check_branch
          %358 = sbr.rel (%p356) target = $region36
        $region35: #{tpu_custom_call.1} parent=11 // pred_region
          _
        $region36: #{tpu_custom_call.1} parent=11 // pred_fallthru
          _
        // Predicated region
        $region37: #{tpu_custom_call.1} parent=11 // pred_check
          %p359 = pneg %p213
        $region38: #{tpu_custom_call.1} parent=11 // pred_check_branch
          %361 = sbr.rel (%p359) target = $region40
        $region39: #{tpu_custom_call.1} parent=11 // pred_region
          _
        $region40: #{tpu_custom_call.1} parent=11 // pred_fallthru
          _
        // Predicated region
        $region41: #{tpu_custom_call.1} parent=11 // pred_check
          %p362 = pneg %p234
        $region42: #{tpu_custom_call.1} parent=11 // pred_check_branch
          %364 = sbr.rel (%p362) target = $region44
        $region43: #{tpu_custom_call.1} parent=11 // pred_region
          _
        $region44: #{tpu_custom_call.1} parent=11 // pred_fallthru
          _
        // Predicated region
        $region45: #{tpu_custom_call.1} parent=11 // pred_check
          %p365 = pneg %p255
        $region46: #{tpu_custom_call.1} parent=11 // pred_check_branch
          %367 = sbr.rel (%p365) target = $region48
        $region47: #{tpu_custom_call.1} parent=11 // pred_region
          _
        $region48: #{tpu_custom_call.1} parent=11 // pred_fallthru
          _
        // Predicated region
        $region49: #{tpu_custom_call.1} parent=11 // pred_check
          %p368 = pneg %p276
        $region50: #{tpu_custom_call.1} parent=11 // pred_check_branch
          %370 = sbr.rel (%p368) target = $region52
        $region51: #{tpu_custom_call.1} parent=11 // pred_region
          _
        $region52: #{tpu_custom_call.1} parent=11 // pred_fallthru
          _
      $region12: #{tpu_custom_call.1} parent=5 // pred_fallthru
        _
      %p371 = scmp.lt.s32.totalorder %s24, 6
      // Predicated region
      $region53: #{tpu_custom_call.1} parent=5 // pred_check
        %p372 = pneg %p371
      $region54: #{tpu_custom_call.1} parent=5 // pred_check_branch
        %374 = sbr.rel (%p372) target = $region56
      $region55: #{tpu_custom_call.1} parent=5 // pred_region
        // Predicated region
        $region57: #{tpu_custom_call.1} parent=55 // pred_check
          %p375 = pneg %p60
        $region58: #{tpu_custom_call.1} parent=55 // pred_check_branch
          %377 = sbr.rel (%p375) target = $region60
        $region59: #{tpu_custom_call.1} parent=55 // pred_region
          %s378 = sand.u32 %s50, 1
          %s379 = scalar_lea.sflag [#allocation12], %s378
          %s380 = sand.u32 %s50, 1
          %s381 = smul.addr %s380, 8
          %s382 = scalar_lea.vmem [#allocation11], %s381
          %p383 = scmp.eq.s32.totalorder %s31, 0
          %s384 = scalar_select %p383, %s32, 0
          %s385 = smul.u32 2, %s384
          %s387 = ssub.s32 128, 128
          %388 = vsyncadd %s379, %s387
          %s389 = smul.addr %s385, 64
          %s390 = scalar_lea.hbm %s0, %s389
          %s391 = sshll.u32 %s382, 4
          %s392 = int_to_ptr.vmem [resolvable:$true] %s391
          %397 = dma.hbm_to_vmem [thread:$0]  %s390, 128, %s392, %s379, 64, 64, 4
        $region60: #{tpu_custom_call.1} parent=55 // pred_fallthru
          _
      $region56: #{tpu_custom_call.1} parent=5 // pred_fallthru
        _
      %p398 = scmp.le.s32.totalorder 1, %s24
      %p399 = scmp.lt.s32.totalorder %s24, 7
      %p400 = pnand %p398, %p399
      %p401 = pneg %p400
      // Predicated region
      $region61: #{tpu_custom_call.1} parent=5 // pred_check
        _
      $region62: #{tpu_custom_call.1} parent=5 // pred_check_branch
        %403 = sbr.rel (%p400) target = $region64
      $region63: #{tpu_custom_call.1} parent=5 // pred_region
        %s404 = ssub.s32 %s24, 1
        %s405 = sand.u32 %s53, 1
        %s406 = scalar_lea.sflag [#allocation12], %s405
        %s407 = sand.u32 %s53, 1
        %s408 = smul.addr %s407, 8
        %s409 = scalar_lea.vmem [#allocation11], %s408
        // Predicated region
        $region65: #{tpu_custom_call.1} parent=63 // pred_check
          %p410 = pneg %p66
        $region66: #{tpu_custom_call.1} parent=63 // pred_check_branch
          %412 = sbr.rel (%p410) target = $region68
        $region67: #{tpu_custom_call.1} parent=63 // pred_region
          %413 = dma.done %s406, 128
        $region68: #{tpu_custom_call.1} parent=63 // pred_fallthru
          _
        // Predicated region
        $region69: #{tpu_custom_call.1} parent=63 // pred_check
          %p414 = pneg %p87
        $region70: #{tpu_custom_call.1} parent=63 // pred_check_branch
          %416 = sbr.rel (%p414) target = $region72
        $region71: #{tpu_custom_call.1} parent=63 // pred_region
          %417 = dma.done [#allocation15], 256
        $region72: #{tpu_custom_call.1} parent=63 // pred_fallthru
          _
        // Predicated region
        $region73: #{tpu_custom_call.1} parent=63 // pred_check
          %p418 = pneg %p171
        $region74: #{tpu_custom_call.1} parent=63 // pred_check_branch
          %420 = sbr.rel (%p418) target = $region76
        $region75: #{tpu_custom_call.1} parent=63 // pred_region
          %421 = dma.done [#allocation15], 1024
        $region76: #{tpu_custom_call.1} parent=63 // pred_fallthru
          _
        %s422 = sand.u32 %s53, 1
        %s423 = scalar_lea.sflag [#allocation12], %s422
        %s424 = sand.u32 %s53, 1
        %s425 = smul.addr %s424, 8
        %s426 = scalar_lea.vmem [#allocation11], %s425
        %p427 = pneg %p66
        %p428 = pneg %p63
        %p429 = pneg %p87
        %p430 = pneg %p84
        %p431 = pneg %p108
        %p432 = pneg %p105
        %p433 = pneg %p129
        %p434 = pneg %p126
        %p435 = pneg %p150
        %p436 = pneg %p147
        %p437 = pneg %p171
        %p438 = pneg %p168
        %p439 = pneg %p192
        %p440 = pneg %p189
        %p441 = pneg %p213
        %p442 = pneg %p210
        %p443 = pneg %p234
        %p444 = pneg %p231
        %p445 = pneg %p255
        %p446 = pneg %p252
        %p447 = pneg %p276
        %p448 = pneg %p273
        %p449 = pneg %p306
        %p450 = pneg %p303
        %s451 = sand.u32 %s293, 1
        %s452 = scalar_lea.sflag [#allocation13], %s451
        %s453 = sand.u32 %s293, 1
        %s454 = smul.addr %s453, 16
        %s455 = scalar_lea.vmem [#allocation17], %s454
        %p456 = scmp.eq.s32.totalorder %s33, 0
        %s457 = scalar_select %p456, %s34, 0
        %s458 = smul.u32 2, %s457
        %p459 = scmp.eq.s32.totalorder %s33, 2
        %s460 = scalar_select %p459, %s34, 0
        %s461 = smul.u32 2, %s460
        %s463 = smul.u32 %s34, 16
        %p464 = scmp.eq.s32.totalorder %s33, 0
        // Predicated region
        $region77: #{tpu_custom_call.1} parent=63 // pred_check
          %p465 = pneg %p464
        $region78: #{tpu_custom_call.1} parent=63 // pred_check_branch
          %467 = sbr.rel (%p465) target = $region80
        $region79: #{tpu_custom_call.1} parent=63 // pred_region
          %v468 = vld [vmem:[%s409] sm:$0xf]
          %v469 = vld [vmem:[%s409 + $0x4] sm:$0xf]
          %v470 = vld [vmem:[#allocation14] sm:$0xf]
          %v471 = vld [vmem:[#allocation14 + $0x4] sm:$0xf]
          %v472 = vld [vmem:[#allocation14 + $0x8] sm:$0xf]
          %v473 = vld [vmem:[#allocation14 + $0xc] sm:$0xf]
          %v474 = vld [vmem:[%s2] sm:$0x1]
          %v476 = vlaneseq
          %v477 = vshrl.u32 %v476, 7
          %v478 = vsub.s32 0, %v477
          %v479 = vrot.slane %v474, %v478
          %v483 = vunpack.c.l.b16 %v468
          %v484 = vunpack.c.l.b16 %v469
          %v485 = vpack.c.b16 %v484, %v483
          %v490 = vunpack.c.l.b16 %v470
          %v491 = vunpack.c.l.b16 %v471
          %v492 = vunpack.c.l.b16 %v472
          %v493 = vunpack.c.l.b16 %v473
          %v494 = vpack.c.b16 %v491, %v490
          %v495 = vpack.c.b16 %v493, %v492
          %vm498 = vcmask 261120
          %v500 = vsel %vm498, %v485, 0
          %502 = vmatprep.subr.bf16.mxu0 0
          %503 = vmatpush1.bf16.msra.mxu0 %v494
          %504 = vmatprep.subr.bf16.mxu0 0
          %505 = vmatpush1.bf16.msra.mxu0 %v495
          %506 = vmatprep.subr.bf16.mxu0 0
          %507 = vmatpush1.bf16.msra.mxu0 0
          %508 = vmatprep.subr.bf16.mxu0 0
          %509 = vmatpush1.bf16.msra.mxu0 0
          %510 = vmatprep.subr.bf16.mxu0 0
          %511 = vmatpush1.bf16.msra.mxu0 0
          %512 = vmatprep.subr.bf16.mxu0 0
          %513 = vmatpush1.bf16.msra.mxu0 0
          %514 = vmatprep.subr.bf16.mxu0 0
          %515 = vmatpush1.bf16.msra.mxu0 0
          %516 = vmatprep.subr.bf16.mxu0 0
          %517 = vmatpush1.bf16.msra.mxu0 0
          %518 = vmatprep.subr.bf16.mxu0 0
          %519 = vmatpush1.bf16.msra.mxu0 0
          %520 = vmatprep.subr.bf16.mxu0 0
          %521 = vmatpush1.bf16.msra.mxu0 0
          %522 = vmatprep.subr.bf16.mxu0 0
          %523 = vmatpush1.bf16.msra.mxu0 0
          %524 = vmatprep.subr.bf16.mxu0 0
          %525 = vmatpush1.bf16.msra.mxu0 0
          %526 = vmatprep.subr.bf16.mxu0 0
          %527 = vmatpush1.bf16.msra.mxu0 0
          %528 = vmatprep.subr.bf16.mxu0 0
          %529 = vmatpush1.bf16.msra.mxu0 0
          %530 = vmatprep.subr.bf16.mxu0 0
          %531 = vmatpush1.bf16.msra.mxu0 0
          %532 = vmatprep.subr.bf16.mxu0 0
          %533 = vmatpush1.bf16.msra.mxu0 0
          %534 = vmatprep.mubr.bf16.mxu0 0
          %535 = vmatmul.mubr.bf16.gmra.mrb[0].mxu0 %v500
          %v536 = vpop.f32.mrb[0].mxu0
          %v537 = vadd.f32 %v479, %v536
          %v538 = vpop.f32.mrb[0].mxu0
          %v539 = vpop.f32.mrb[0].mxu0
          %v540 = vadd.f32 %v479, %v539
          %v541 = vpop.f32.mrb[0].mxu0
          %542 = vdwg.mxu0
          %v543 = vpack.c.bf16 %v540, %v537
          %s544 = sshra.s32 %s463, 4
          %s545 = sand.u32 %s463, 15
          %s546 = smul.addr %s544, 8
          %s547 = scalar_lea.vmem [#allocation2], %s546
          %548 = vst [vmem:[%s547] sm:$0xff] %v543
          %v549 = vld [vmem:[%s9] sm:$0xf]
          %v550 = vld [vmem:[%s9 + $0x4] sm:$0xf]
          %v551 = vld [vmem:[%s9 + $0x8] sm:$0xf]
          %v552 = vld [vmem:[%s9 + $0xc] sm:$0xf]
          %v553 = vld [vmem:[%s10] sm:$0x1]
          %v555 = vlaneseq
          %v556 = vshrl.u32 %v555, 7
          %v557 = vsub.s32 0, %v556
          %v558 = vrot.slane %v553, %v557
          %v564 = vunpack.c.l.b16 %v549
          %v565 = vunpack.c.l.b16 %v550
          %v566 = vunpack.c.l.b16 %v551
          %v567 = vunpack.c.l.b16 %v552
          %v568 = vpack.c.b16 %v565, %v564
          %v569 = vpack.c.b16 %v567, %v566
          %572 = vmatprep.subr.bf16.mxu0 0
          %573 = vmatpush1.bf16.msra.mxu0 %v568
          %574 = vmatprep.subr.bf16.mxu0 0
          %575 = vmatpush1.bf16.msra.mxu0 %v569
          %576 = vmatprep.subr.bf16.mxu0 0
          %577 = vmatpush1.bf16.msra.mxu0 0
          %578 = vmatprep.subr.bf16.mxu0 0
          %579 = vmatpush1.bf16.msra.mxu0 0
          %580 = vmatprep.subr.bf16.mxu0 0
          %581 = vmatpush1.bf16.msra.mxu0 0
          %582 = vmatprep.subr.bf16.mxu0 0
          %583 = vmatpush1.bf16.msra.mxu0 0
          %584 = vmatprep.subr.bf16.mxu0 0
          %585 = vmatpush1.bf16.msra.mxu0 0
          %586 = vmatprep.subr.bf16.mxu0 0
          %587 = vmatpush1.bf16.msra.mxu0 0
          %588 = vmatprep.subr.bf16.mxu0 0
          %589 = vmatpush1.bf16.msra.mxu0 0
          %590 = vmatprep.subr.bf16.mxu0 0
          %591 = vmatpush1.bf16.msra.mxu0 0
          %592 = vmatprep.subr.bf16.mxu0 0
          %593 = vmatpush1.bf16.msra.mxu0 0
          %594 = vmatprep.subr.bf16.mxu0 0
          %595 = vmatpush1.bf16.msra.mxu0 0
          %596 = vmatprep.subr.bf16.mxu0 0
          %597 = vmatpush1.bf16.msra.mxu0 0
          %598 = vmatprep.subr.bf16.mxu0 0
          %599 = vmatpush1.bf16.msra.mxu0 0
          %600 = vmatprep.subr.bf16.mxu0 0
          %601 = vmatpush1.bf16.msra.mxu0 0
          %602 = vmatprep.subr.bf16.mxu0 0
          %603 = vmatpush1.bf16.msra.mxu0 0
          %604 = vmatprep.mubr.bf16.mxu0 0
          %605 = vmatmul.mubr.bf16.gmra.mrb[0].mxu0 %v500
          %v606 = vpop.f32.mrb[0].mxu0
          %v607 = vadd.f32 %v558, %v606
          %v608 = vpop.f32.mrb[0].mxu0
          %v609 = vpop.f32.mrb[0].mxu0
          %v610 = vadd.f32 %v558, %v609
          %v611 = vpop.f32.mrb[0].mxu0
          %612 = vdwg.mxu0
          %vm613 = vcmp.ge.f32.partialorder %v607, 0.0
          %vm614 = vcmp.ge.f32.partialorder %v610, 0.0
          %v615 = vmul.f32 %v607, 0.2
          %v616 = vmul.f32 %v610, 0.2
          %v617 = vsel %vm613, %v607, %v615
          %v618 = vsel %vm614, %v610, %v616
          %v619 = vpack.c.bf16 %v618, %v617
          %s620 = smul.addr %s544, 8
          %s621 = scalar_lea.vmem [#allocation4], %s620
          %622 = vst [vmem:[%s621] sm:$0xff] %v619
          %p623 = scmp.eq.s32.totalorder %s34, 0
          // Predicated region
          $region81: #{tpu_custom_call.1} parent=79 // pred_check
            %p624 = pneg %p623
          $region82: #{tpu_custom_call.1} parent=79 // pred_check_branch
            %626 = sbr.rel (%p624) target = $region84
          $region83: #{tpu_custom_call.1} parent=79 // pred_region
            %v627 = vadd.f32 %v537, %v540
            %v628 = vrot.slane %v627, 4
            %v629 = vadd.f32 %v627, %v628
            %v630 = vrot.slane %v629, 2
            %v631 = vadd.f32 %v629, %v630
            %v632 = vrot.slane %v631, 1
            %v633 = vadd.f32 %v631, %v632
            %v634 = vmul.f32 %v633, 0.0625
            %635 = vst [vmem:[#allocation5] sm:$0x1] %v634
            %636 = vst [vmem:[#allocation6] sm:$0x1] 0.0
            %637 = vst [vmem:[#allocation7] sm:$0x1] 0.0
          $region84: #{tpu_custom_call.1} parent=79 // pred_fallthru
            _
          %v638 = vld [vmem:[#allocation5] sm:$0x1]
          %v640 = vlaneseq
          %v641 = vshrl.u32 %v640, 7
          %v642 = vsub.s32 0, %v641
          %v643 = vrot.slane %v638, %v642
          %v645 = vsub.f32 %v537, %v643
          %v646 = vsub.f32 %v540, %v643
          %v647 = vlaneseq
          %v648 = vshrl.u32 %v647, 7
          %v649 = vadd.s32 %v648, 8
          %v650 = vstv %s463
          %v651 = vadd.s32 %v650, %v648
          %v652 = vadd.s32 %v650, %v649
          %vm653 = vcmp.lt.s32.totalorder %v651, 20
          %vm654 = vcmp.lt.s32.totalorder %v652, 20
          %v655 = vsel %vm653, 1, 0
          %v656 = vsel %vm654, 1, 0
          %vm657 = vcmp.eq.s32.totalorder %v655, 1
          %vm658 = vcmp.eq.s32.totalorder %v656, 1
          %v659 = vsel %vm657, %v645, 0.0
          %v660 = vsel %vm658, %v646, 0.0
          %v661 = vld [vmem:[#allocation6] sm:$0x1]
          %v662 = vadd.f32 %v659, %v660
          %v663 = vrot.slane %v662, 4
          %v664 = vadd.f32 %v662, %v663
          %v665 = vrot.slane %v664, 2
          %v666 = vadd.f32 %v664, %v665
          %v667 = vrot.slane %v666, 1
          %v668 = vadd.f32 %v666, %v667
          %v669 = vadd.f32 %v661, %v668
          %670 = vst [vmem:[#allocation6] sm:$0x1] %v669
          %v671 = vld [vmem:[#allocation7] sm:$0x1]
          %v672 = vmul.f32 %v659, %v659
          %v673 = vmul.f32 %v660, %v660
          %v674 = vadd.f32 %v672, %v673
          %v675 = vrot.slane %v674, 4
          %v676 = vadd.f32 %v674, %v675
          %v677 = vrot.slane %v676, 2
          %v678 = vadd.f32 %v676, %v677
          %v679 = vrot.slane %v678, 1
          %v680 = vadd.f32 %v678, %v679
          %v681 = vadd.f32 %v671, %v680
          %682 = vst [vmem:[#allocation7] sm:$0x1] %v681
        $region80: #{tpu_custom_call.1} parent=63 // pred_fallthru
          _
        %p683 = scmp.eq.s32.totalorder %s33, 1
        // Predicated region
        $region85: #{tpu_custom_call.1} parent=63 // pred_check
          %p684 = pneg %p683
        $region86: #{tpu_custom_call.1} parent=63 // pred_check_branch
          %686 = sbr.rel (%p684) target = $region88
        $region87: #{tpu_custom_call.1} parent=63 // pred_region
          %p687 = scmp.eq.s32.totalorder %s34, 0
          // Predicated region
          $region89: #{tpu_custom_call.1} parent=87 // pred_check
            %p688 = pneg %p687
          $region90: #{tpu_custom_call.1} parent=87 // pred_check_branch
            %690 = sbr.rel (%p688) target = $region92
          $region91: #{tpu_custom_call.1} parent=87 // pred_region
            %v691 = vld [vmem:[#allocation6] sm:$0x1]
            %v692 = vmul.f32 %v691, 0.05
            %v693 = vld [vmem:[#allocation7] sm:$0x1]
            %v694 = vmul.f32 %v693, 0.05
            %v695 = vmul.f32 %v692, %v692
            %v696 = vsub.f32 %v694, %v695
            %v697 = vmax.f32 %v696, 0.0
            %v698 = vld [vmem:[#allocation5] sm:$0x1]
            %v699 = vadd.f32 %v698, %v692
            %v700 = vld [vmem:[%s3] sm:$0x1]
            %v701 = vadd.f32 %v697, 1e-05
            %v702 = vrsqrt.pop %v701
            %v703 = vmul.f32 %v700, %v702
            %v704 = vld [vmem:[%s4] sm:$0x1]
            %v705 = vmul.f32 %v699, %v703
            %v706 = vsub.f32 %v704, %v705
            %707 = vst [vmem:[#allocation6] sm:$0x1] %v703
            %708 = vst [vmem:[#allocation7] sm:$0x1] %v706
          $region92: #{tpu_custom_call.1} parent=87 // pred_fallthru
            _
          %s709 = sshra.s32 %s463, 4
          %s710 = sand.u32 %s463, 15
          %s711 = smul.addr %s709, 8
          %s712 = scalar_lea.vmem [#allocation2], %s711
          %v713 = vld [vmem:[%s712] sm:$0xff]
          %v714 = vunpack.c.l.bf16 %v713
          %v715 = vunpack.c.h.bf16 %v713
          %v716 = vld [vmem:[#allocation6] sm:$0x1]
          %v718 = vlaneseq
          %v719 = vshrl.u32 %v718, 7
          %v720 = vsub.s32 0, %v719
          %v721 = vrot.slane %v716, %v720
          %v723 = vmul.f32 %v714, %v721
          %v724 = vmul.f32 %v715, %v721
          %v725 = vld [vmem:[#allocation7] sm:$0x1]
          %v727 = vlaneseq
          %v728 = vshrl.u32 %v727, 7
          %v729 = vsub.s32 0, %v728
          %v730 = vrot.slane %v725, %v729
          %v732 = vadd.f32 %v723, %v730
          %v733 = vadd.f32 %v724, %v730
          %vm734 = vcmp.ge.f32.partialorder %v732, 0.0
          %vm735 = vcmp.ge.f32.partialorder %v733, 0.0
          %v736 = vmul.f32 %v732, 0.2
          %v737 = vmul.f32 %v733, 0.2
          %v738 = vsel %vm734, %v732, %v736
          %v739 = vsel %vm735, %v733, %v737
          %v740 = vpack.c.bf16 %v739, %v738
          %v741 = vld [vmem:[#allocation16] sm:$0xf]
          %v742 = vld [vmem:[#allocation16 + $0x4] sm:$0xf]
          %v743 = vld [vmem:[#allocation16 + $0x8] sm:$0xf]
          %v744 = vld [vmem:[#allocation16 + $0xc] sm:$0xf]
          %v745 = vld [vmem:[#allocation16 + $0x10] sm:$0xf]
          %v746 = vld [vmem:[#allocation16 + $0x14] sm:$0xf]
          %v747 = vld [vmem:[#allocation16 + $0x18] sm:$0xf]
          %v748 = vld [vmem:[#allocation16 + $0x1c] sm:$0xf]
          %v749 = vld [vmem:[#allocation16 + $0x20] sm:$0xf]
          %v750 = vld [vmem:[#allocation16 + $0x24] sm:$0xf]
          %v751 = vld [vmem:[#allocation16 + $0x28] sm:$0xf]
          %v752 = vld [vmem:[#allocation16 + $0x2c] sm:$0xf]
          %v753 = vld [vmem:[#allocation16 + $0x30] sm:$0xf]
          %v754 = vld [vmem:[#allocation16 + $0x34] sm:$0xf]
          %v755 = vld [vmem:[#allocation16 + $0x38] sm:$0xf]
          %v756 = vld [vmem:[#allocation16 + $0x3c] sm:$0xf]
          %v757 = vld [vmem:[%s6] sm:$0x1]
          %v759 = vlaneseq
          %v760 = vshrl.u32 %v759, 7
          %v761 = vsub.s32 0, %v760
          %v762 = vrot.slane %v757, %v761
          %v780 = vunpack.c.l.b16 %v741
          %v781 = vunpack.c.l.b16 %v742
          %v782 = vunpack.c.l.b16 %v743
          %v783 = vunpack.c.l.b16 %v744
          %v784 = vunpack.c.l.b16 %v745
          %v785 = vunpack.c.l.b16 %v746
          %v786 = vunpack.c.l.b16 %v747
          %v787 = vunpack.c.l.b16 %v748
          %v788 = vunpack.c.l.b16 %v749
          %v789 = vunpack.c.l.b16 %v750
          %v790 = vunpack.c.l.b16 %v751
          %v791 = vunpack.c.l.b16 %v752
          %v792 = vunpack.c.l.b16 %v753
          %v793 = vunpack.c.l.b16 %v754
          %v794 = vunpack.c.l.b16 %v755
          %v795 = vunpack.c.l.b16 %v756
          %v796 = vpack.c.b16 %v781, %v780
          %v797 = vpack.c.b16 %v783, %v782
          %v798 = vpack.c.b16 %v785, %v784
          %v799 = vpack.c.b16 %v787, %v786
          %v800 = vpack.c.b16 %v789, %v788
          %v801 = vpack.c.b16 %v791, %v790
          %v802 = vpack.c.b16 %v793, %v792
          %v803 = vpack.c.b16 %v795, %v794
          %812 = vmatprep.subr.bf16.mxu0 0
          %813 = vmatpush1.bf16.msra.mxu0 %v796
          %814 = vmatprep.subr.bf16.mxu0 0
          %815 = vmatpush1.bf16.msra.mxu0 %v797
          %816 = vmatprep.subr.bf16.mxu0 0
          %817 = vmatpush1.bf16.msra.mxu0 %v798
          %818 = vmatprep.subr.bf16.mxu0 0
          %819 = vmatpush1.bf16.msra.mxu0 %v799
          %820 = vmatprep.subr.bf16.mxu0 0
          %821 = vmatpush1.bf16.msra.mxu0 %v800
          %822 = vmatprep.subr.bf16.mxu0 0
          %823 = vmatpush1.bf16.msra.mxu0 %v801
          %824 = vmatprep.subr.bf16.mxu0 0
          %825 = vmatpush1.bf16.msra.mxu0 %v802
          %826 = vmatprep.subr.bf16.mxu0 0
          %827 = vmatpush1.bf16.msra.mxu0 %v803
          %828 = vmatprep.subr.bf16.mxu0 0
          %829 = vmatpush1.bf16.msra.mxu0 0
          %830 = vmatprep.subr.bf16.mxu0 0
          %831 = vmatpush1.bf16.msra.mxu0 0
          %832 = vmatprep.subr.bf16.mxu0 0
          %833 = vmatpush1.bf16.msra.mxu0 0
          %834 = vmatprep.subr.bf16.mxu0 0
          %835 = vmatpush1.bf16.msra.mxu0 0
          %836 = vmatprep.subr.bf16.mxu0 0
          %837 = vmatpush1.bf16.msra.mxu0 0
          %838 = vmatprep.subr.bf16.mxu0 0
          %839 = vmatpush1.bf16.msra.mxu0 0
          %840 = vmatprep.subr.bf16.mxu0 0
          %841 = vmatpush1.bf16.msra.mxu0 0
          %842 = vmatprep.subr.bf16.mxu0 0
          %843 = vmatpush1.bf16.msra.mxu0 0
          %844 = vmatprep.mubr.bf16.mxu0 0
          %845 = vmatmul.mubr.bf16.gmra.mrb[0].mxu0 %v740
          %v846 = vpop.f32.mrb[0].mxu0
          %v847 = vadd.f32 %v762, %v846
          %v848 = vpop.f32.mrb[0].mxu0
          %v849 = vpop.f32.mrb[0].mxu0
          %v850 = vadd.f32 %v762, %v849
          %v851 = vpop.f32.mrb[0].mxu0
          %852 = vdwg.mxu0
          %s853 = scalar_lea.vmem [#allocation3], %s463
          %854 = vst [vmem:[%s853] sm:$0xff] %v847
          %855 = vst [vmem:[%s853 + $0x8] sm:$0xff] %v850
          // Predicated region
          $region93: #{tpu_custom_call.1} parent=87 // pred_check
            %p856 = pneg %p687
          $region94: #{tpu_custom_call.1} parent=87 // pred_check_branch
            %858 = sbr.rel (%p856) target = $region96
          $region95: #{tpu_custom_call.1} parent=87 // pred_region
            %v859 = vadd.f32 %v847, %v850
            %v860 = vrot.slane %v859, 4
            %v861 = vadd.f32 %v859, %v860
            %v862 = vrot.slane %v861, 2
            %v863 = vadd.f32 %v861, %v862
            %v864 = vrot.slane %v863, 1
            %v865 = vadd.f32 %v863, %v864
            %v866 = vmul.f32 %v865, 0.0625
            %867 = vst [vmem:[#allocation8] sm:$0x1] %v866
            %868 = vst [vmem:[#allocation9] sm:$0x1] 0.0
            %869 = vst [vmem:[#allocation10] sm:$0x1] 0.0
          $region96: #{tpu_custom_call.1} parent=87 // pred_fallthru
            _
          %v870 = vld [vmem:[#allocation8] sm:$0x1]
          %v872 = vlaneseq
          %v873 = vshrl.u32 %v872, 7
          %v874 = vsub.s32 0, %v873
          %v875 = vrot.slane %v870, %v874
          %v877 = vsub.f32 %v847, %v875
          %v878 = vsub.f32 %v850, %v875
          %v879 = vlaneseq
          %v880 = vshrl.u32 %v879, 7
          %v881 = vadd.s32 %v880, 8
          %v882 = vstv %s463
          %v883 = vadd.s32 %v882, %v880
          %v884 = vadd.s32 %v882, %v881
          %vm885 = vcmp.lt.s32.totalorder %v883, 20
          %vm886 = vcmp.lt.s32.totalorder %v884, 20
          %v887 = vsel %vm885, 1, 0
          %v888 = vsel %vm886, 1, 0
          %vm889 = vcmp.eq.s32.totalorder %v887, 1
          %vm890 = vcmp.eq.s32.totalorder %v888, 1
          %v891 = vsel %vm889, %v877, 0.0
          %v892 = vsel %vm890, %v878, 0.0
          %v893 = vld [vmem:[#allocation9] sm:$0x1]
          %v894 = vadd.f32 %v891, %v892
          %v895 = vrot.slane %v894, 4
          %v896 = vadd.f32 %v894, %v895
          %v897 = vrot.slane %v896, 2
          %v898 = vadd.f32 %v896, %v897
          %v899 = vrot.slane %v898, 1
          %v900 = vadd.f32 %v898, %v899
          %v901 = vadd.f32 %v893, %v900
          %902 = vst [vmem:[#allocation9] sm:$0x1] %v901
          %v903 = vld [vmem:[#allocation10] sm:$0x1]
          %v904 = vmul.f32 %v891, %v891
          %v905 = vmul.f32 %v892, %v892
          %v906 = vadd.f32 %v904, %v905
          %v907 = vrot.slane %v906, 4
          %v908 = vadd.f32 %v906, %v907
          %v909 = vrot.slane %v908, 2
          %v910 = vadd.f32 %v908, %v909
          %v911 = vrot.slane %v910, 1
          %v912 = vadd.f32 %v910, %v911
          %v913 = vadd.f32 %v903, %v912
          %914 = vst [vmem:[#allocation10] sm:$0x1] %v913
        $region88: #{tpu_custom_call.1} parent=63 // pred_fallthru
          _
        %p915 = scmp.eq.s32.totalorder %s33, 2
        // Predicated region
        $region97: #{tpu_custom_call.1} parent=63 // pred_check
          %p916 = pneg %p915
        $region98: #{tpu_custom_call.1} parent=63 // pred_check_branch
          %918 = sbr.rel (%p916) target = $region100
        $region99: #{tpu_custom_call.1} parent=63 // pred_region
          %p919 = scmp.eq.s32.totalorder %s34, 0
          // Predicated region
          $region101: #{tpu_custom_call.1} parent=99 // pred_check
            %p920 = pneg %p919
          $region102: #{tpu_custom_call.1} parent=99 // pred_check_branch
            %922 = sbr.rel (%p920) target = $region104
          $region103: #{tpu_custom_call.1} parent=99 // pred_region
            %v923 = vld [vmem:[#allocation9] sm:$0x1]
            %v924 = vmul.f32 %v923, 0.05
            %v925 = vld [vmem:[#allocation10] sm:$0x1]
            %v926 = vmul.f32 %v925, 0.05
            %v927 = vmul.f32 %v924, %v924
            %v928 = vsub.f32 %v926, %v927
            %v929 = vmax.f32 %v928, 0.0
            %v930 = vld [vmem:[#allocation8] sm:$0x1]
            %v931 = vadd.f32 %v930, %v924
            %v932 = vld [vmem:[%s7] sm:$0x1]
            %v933 = vadd.f32 %v929, 1e-05
            %v934 = vrsqrt.pop %v933
            %v935 = vmul.f32 %v932, %v934
            %v936 = vld [vmem:[%s8] sm:$0x1]
            %v937 = vmul.f32 %v931, %v935
            %v938 = vsub.f32 %v936, %v937
            %939 = vst [vmem:[#allocation9] sm:$0x1] %v935
            %940 = vst [vmem:[#allocation10] sm:$0x1] %v938
          $region104: #{tpu_custom_call.1} parent=99 // pred_fallthru
            _
          %s941 = sshra.s32 %s463, 4
          %s942 = sand.u32 %s463, 15
          %s943 = smul.addr %s941, 8
          %s944 = scalar_lea.vmem [#allocation4], %s943
          %v945 = vld [vmem:[%s944] sm:$0xff]
          %v946 = vunpack.c.l.bf16 %v945
          %v947 = vunpack.c.h.bf16 %v945
          %s948 = scalar_lea.vmem [#allocation3], %s463
          %v949 = vld [vmem:[%s948] sm:$0xff]
          %v950 = vld [vmem:[%s948 + $0x8] sm:$0xff]
          %v951 = vld [vmem:[#allocation9] sm:$0x1]
          %v953 = vlaneseq
          %v954 = vshrl.u32 %v953, 7
          %v955 = vsub.s32 0, %v954
          %v956 = vrot.slane %v951, %v955
          %v958 = vmul.f32 %v949, %v956
          %v959 = vmul.f32 %v950, %v956
          %v960 = vadd.f32 %v946, %v958
          %v961 = vadd.f32 %v947, %v959
          %v962 = vld [vmem:[#allocation10] sm:$0x1]
          %v964 = vlaneseq
          %v965 = vshrl.u32 %v964, 7
          %v966 = vsub.s32 0, %v965
          %v967 = vrot.slane %v962, %v966
          %v969 = vadd.f32 %v960, %v967
          %v970 = vadd.f32 %v961, %v967
          %vm971 = vcmp.ge.f32.partialorder %v969, 0.0
          %vm972 = vcmp.ge.f32.partialorder %v970, 0.0
          %v973 = vmul.f32 %v969, 0.2
          %v974 = vmul.f32 %v970, 0.2
          %v975 = vsel %vm971, %v969, %v973
          %v976 = vsel %vm972, %v970, %v974
          %977 = vst [vmem:[%s455] sm:$0xff] %v975
          %978 = vst [vmem:[%s455 + $0x8] sm:$0xff] %v976
        $region100: #{tpu_custom_call.1} parent=63 // pred_fallthru
          _
        %s979 = sand.u32 %s293, 1
        %s980 = scalar_lea.sflag [#allocation13], %s979
        %s981 = sand.u32 %s293, 1
        %s982 = smul.addr %s981, 16
        %s983 = scalar_lea.vmem [#allocation17], %s982
        // Predicated region
        $region105: #{tpu_custom_call.1} parent=63 // pred_check
          %p984 = pneg %p303
        $region106: #{tpu_custom_call.1} parent=63 // pred_check_branch
          %986 = sbr.rel (%p984) target = $region108
        $region107: #{tpu_custom_call.1} parent=63 // pred_region
          %p987 = scmp.eq.s32.totalorder %s33, 2
          %s988 = scalar_select %p987, %s34, 0
          %s989 = smul.u32 2, %s988
          %s991 = ssub.s32 256, 256
          %992 = vsyncadd %s980, %s991
          %s993 = smul.addr %s989, 128
          %s994 = scalar_lea.hbm %s11, %s993
          %s995 = sshll.u32 %s983, 4
          %s996 = int_to_ptr.vmem [resolvable:$true] %s995
          %1001 = dma.vmem_to_hbm [thread:$0]  %s996, 256, %s994, %s980, 128, 128, 8
        $region108: #{tpu_custom_call.1} parent=63 // pred_fallthru
          _
      $region64: #{tpu_custom_call.1} parent=5 // pred_fallthru
        _
      %p1002 = scmp.le.s32.totalorder 2, %s24
      // Predicated region
      $region109: #{tpu_custom_call.1} parent=5 // pred_check
        %p1003 = pneg %p1002
      $region110: #{tpu_custom_call.1} parent=5 // pred_check_branch
        %1005 = sbr.rel (%p1003) target = $region112
      $region111: #{tpu_custom_call.1} parent=5 // pred_region
        %s1006 = ssub.s32 %s24, 2
        // Predicated region
        $region113: #{tpu_custom_call.1} parent=111 // pred_check
          %p1007 = pneg %p309
        $region114: #{tpu_custom_call.1} parent=111 // pred_check_branch
          %1009 = sbr.rel (%p1007) target = $region116
        $region115: #{tpu_custom_call.1} parent=111 // pred_region
          %s1010 = sand.u32 %s294, 1
          %s1011 = scalar_lea.sflag [#allocation13], %s1010
          %s1012 = sand.u32 %s294, 1
          %s1013 = smul.addr %s1012, 16
          %s1014 = scalar_lea.vmem [#allocation17], %s1013
          %1015 = dma.done %s1011, 256
        $region116: #{tpu_custom_call.1} parent=111 // pred_fallthru
          _
      $region112: #{tpu_custom_call.1} parent=5 // pred_fallthru
        _
    $region6: #{tpu_custom_call.1} parent=1 // loop_footer
      %s28 = sadd.s32 1, %s24
    $region7: #{tpu_custom_call.1} parent=1 // loop_footer_branch
      %23 = sbr.rel target = $region3
    $region8: #{tpu_custom_call.1} parent=1 // loop_exit
      _
    %1016 = vsyncpa [#allocation12], 1
    %s1017 = scalar_lea.sflag [#allocation12], 1
    %1018 = vsyncpa %s1017, 1
    %1019 = vsyncpa [#allocation15], 1
    %1020 = vsyncpa [#allocation13], 1
    %s1021 = scalar_lea.sflag [#allocation13], 1
    %1022 = vsyncpa %s1021, 1

</llo_original>
